<compile_context>
chip_gen: v6e
topology: v6e:2x2x1
jax: 0.10.0
libtpu: 0.0.40
codegen_flags: <defaults>
</compile_context>

<pallas_src>
import numpy as np
import jax
import jax.numpy as jnp
from jax.experimental import pallas as pl
from jax.experimental.pallas import tpu as pltpu

IN_LEN = 100
IN_CH = 1
C1 = 8
C2 = 8
FLAT = C2 * IN_LEN // 4      # 200
FC1 = 36
HID = 20
K = 5

LANE = 128


def _rup(n, m):
    return ((n + m - 1) // m) * m


# Lane-padded feature widths for every slab in the chain.
P_IN = _rup(IN_CH * IN_LEN, LANE)        # 100 -> 128
P_H1 = _rup(C1 * (IN_LEN // 2), LANE)    # 400 -> 512
P_H2 = _rup(C2 * (IN_LEN // 4), LANE)    # 200 -> 256
P_FC1 = _rup(FC1, LANE)                  # 36  -> 128
P_HID = _rup(HID, LANE)                  # 20  -> 128
P_H6 = P_H2                              # 200 -> 256
P_H7 = _rup(C1 * (IN_LEN // 2), LANE)    # 400 -> 512
P_OUT = _rup(IN_CH * IN_LEN, LANE)       # 100 -> 128


# ----------------------- conv -> matmul unrolling (host-side glue) -----------------------
def conv1d_matrix(w, L, pad):
    """w: (Cout, Cin, K).  Returns M of shape (Cin*L, Cout*L) such that
    flatten(conv1d(x)) == flatten(x) @ M  (channel-major flatten)."""
    Co, Ci, Kk = w.shape
    M = np.zeros((Ci * L, Co * L), np.float32)
    for co in range(Co):
        for ci in range(Ci):
            for k in range(Kk):
                for l in range(L):
                    i = l - pad + k
                    if 0 <= i < L:
                        M[ci * L + i, co * L + l] = w[co, ci, k]
    return M


def convT1d_matrix(w, L_in, stride, pad, out_pad):
    """w: (Cin, Cout, K)  (PyTorch ConvTranspose1d weight layout)."""
    Ci, Co, Kk = w.shape
    L_out = (L_in - 1) * stride - 2 * pad + Kk + out_pad
    M = np.zeros((Ci * L_in, Co * L_out), np.float32)
    for ci in range(Ci):
        for co in range(Co):
            for k in range(Kk):
                for i in range(L_in):
                    l = i * stride - pad + k
                    if 0 <= l < L_out:
                        M[ci * L_in + i, co * L_out + l] = w[ci, co, k]
    return M, L_out


def split_even_odd(M, Co, L):
    """Split output columns into even/odd positions so MaxPool1d(2) becomes an
    elementwise max of two matmul results."""
    M3 = M.reshape(M.shape[0], Co, L)
    even = np.ascontiguousarray(M3[:, :, 0::2]).reshape(M.shape[0], Co * (L // 2))
    odd = np.ascontiguousarray(M3[:, :, 1::2]).reshape(M.shape[0], Co * (L // 2))
    return even, odd


def _pad2d(m, rows, cols):
    out = np.zeros((rows, cols), np.float32)
    out[: m.shape[0], : m.shape[1]] = m
    return out


# --------------------------------- kernel ---------------------------------
def frame_cnn_kernel(x_ref,
                     w1e_ref, w1o_ref, b1_ref,
                     w2e_ref, w2o_ref, b2_ref,
                     wf1_ref, bf1_ref, wf2_ref, bf2_ref,
                     wd1_ref, bd1_ref, wd2_ref, bd2_ref,
                     wt2_ref, bt2_ref, wt3_ref, bt3_ref,
                     o_ref):
    f32 = jnp.float32
    x = x_ref[...]

    def mm(a, w_ref):
        return jnp.dot(a, w_ref[...], preferred_element_type=f32)

    # encoder1: Conv1d(1->8, k=5, p=2) + ReLU + MaxPool1d(2)
    #   max(relu(e+b), relu(o+b)) == relu(max(e, o) + b)  (bias/ReLU hoisted)
    h = jnp.maximum(jnp.maximum(mm(x, w1e_ref), mm(x, w1o_ref)) + b1_ref[...], 0.0)
    # encoder2: Conv1d(8->8, k=5, p=2) + ReLU + MaxPool1d(2)
    h = jnp.maximum(jnp.maximum(mm(h, w2e_ref), mm(h, w2o_ref)) + b2_ref[...], 0.0)
    # encoder3: Flatten (already flat) + Linear(200,36) + ReLU + Linear(36,20)
    h = jnp.maximum(mm(h, wf1_ref) + bf1_ref[...], 0.0)
    h = mm(h, wf2_ref) + bf2_ref[...]
    # TODO(synk): nn.Dropout(0.3) is identity at inference; training-mode masking not implemented.
    # decoder1: Linear(20,36) + ReLU + Linear(36,200) + Unflatten (no-op in flat layout)
    h = jnp.maximum(mm(h, wd1_ref) + bd1_ref[...], 0.0)
    h = mm(h, wd2_ref) + bd2_ref[...]
    # decoder2: ConvTranspose1d(8->8, k=5, s=2, p=2, op=1) + ReLU
    h = jnp.maximum(mm(h, wt2_ref) + bt2_ref[...], 0.0)
    # decoder3: ConvTranspose1d(8->1, k=5, s=2, p=2, op=1) + Sigmoid (via EUP tanh)
    z = mm(h, wt3_ref) + bt3_ref[...]
    o_ref[...] = 0.5 * (jnp.tanh(0.5 * z) + 1.0)


def frame_cnn_forward(x, kparams):
    """x: (B, 1, 100) float32, NCL like PyTorch.  Returns (B, 1, 100)."""
    B = x.shape[0]
    # Batch tile: multiple of 8 sublanes; cap at 256 (MXU-row sized on v6e/v7x,
    # comfortably inside v7x's 64 MiB VMEM with weights resident).
    TB = 256 if B >= 256 else _rup(max(B, 1), 8)
    B_pad = _rup(B, TB)

    x_flat = jnp.asarray(x, jnp.float32).reshape(B, IN_CH * IN_LEN)
    x_pad = jnp.zeros((B_pad, P_IN), jnp.float32).at[:B, : IN_CH * IN_LEN].set(x_flat)
    operands = (x_pad,) + tuple(kparams)

    def const_spec(a):
        nd = a.ndim
        return pl.BlockSpec(a.shape, lambda i, _nd=nd: (0,) * _nd)

    in_specs = [pl.BlockSpec((TB, P_IN), lambda i: (i, 0))]
    in_specs += [const_spec(a) for a in kparams]
    out_specs = pl.BlockSpec((TB, P_OUT), lambda i: (i, 0))

    # Advisory cost estimate (padded dims).
    matmul_kn = (2 * P_IN * P_H1 + 2 * P_H1 * P_H2 + P_H2 * P_FC1 + P_FC1 * P_HID
                 + P_HID * P_FC1 + P_FC1 * P_H6 + P_H6 * P_H7 + P_H7 * P_OUT)
    weight_bytes = sum(int(np.prod(a.shape)) * 4 for a in kparams)
    cost = pl.CostEstimate(
        flops=int(2 * B_pad * matmul_kn),
        transcendentals=int(B_pad * P_OUT),
        bytes_accessed=int(weight_bytes + B_pad * (P_IN + P_OUT) * 4),
    )

    out = pl.pallas_call(
        frame_cnn_kernel,
        out_shape=jax.ShapeDtypeStruct((B_pad, P_OUT), jnp.float32),
        grid=(B_pad // TB,),
        in_specs=in_specs,
        out_specs=out_specs,
        compiler_params=pltpu.CompilerParams(
            dimension_semantics=("parallel",)),
        cost_estimate=cost,
    )(*operands)

    return out[:B, :IN_CH * IN_LEN].reshape(B, IN_CH, IN_LEN)


# ------------------------ deterministic parameter init ------------------------
def init_params(key):
    def uniform(k, shape, fan_in):
        bound = 1.0 / np.sqrt(fan_in)
        return np.asarray(jax.random.uniform(k, shape, jnp.float32, -bound, bound))

    ks = jax.random.split(key, 16)
    p = {}
    p["conv1_w"] = uniform(ks[0], (C1, IN_CH, K), IN_CH * K)
    p["conv1_b"] = uniform(ks[1], (C1,), IN_CH * K)
    p["conv2_w"] = uniform(ks[2], (C2, C1, K), C1 * K)
    p["conv2_b"] = uniform(ks[3], (C2,), C1 * K)
    p["fc1_w"] = uniform(ks[4], (FC1, FLAT), FLAT)
    p["fc1_b"] = uniform(ks[5], (FC1,), FLAT)
    p["fc2_w"] = uniform(ks[6], (HID, FC1), FC1)
    p["fc2_b"] = uniform(ks[7], (HID,), FC1)
    p["dfc1_w"] = uniform(ks[8], (FC1, HID), HID)
    p["dfc1_b"] = uniform(ks[9], (FC1,), HID)
    p["dfc2_w"] = uniform(ks[10], (FLAT, FC1), FC1)
    p["dfc2_b"] = uniform(ks[11], (FLAT,), FC1)
    p["dct2_w"] = uniform(ks[12], (C2, C1, K), C1 * K)     # (in, out, K)
    p["dct2_b"] = uniform(ks[13], (C1,), C1 * K)
    p["dct3_w"] = uniform(ks[14], (C1, IN_CH, K), C1 * K)  # (in, out, K)
    p["dct3_b"] = uniform(ks[15], (IN_CH,), C1 * K)
    return p


def build_kernel_params(p):
    """Unroll convs to dense matrices and zero-pad everything to lane-dense
    (multiple-of-128) shapes.  Padded weight rows/cols and bias entries are
    zero, so padded activation columns stay exactly zero end-to-end."""
    W1 = conv1d_matrix(p["conv1_w"], IN_LEN, K // 2)
    W1e, W1o = split_even_odd(W1, C1, IN_LEN)
    b1 = np.repeat(p["conv1_b"], IN_LEN // 2)[None, :]

    L1 = IN_LEN // 2
    W2 = conv1d_matrix(p["conv2_w"], L1, K // 2)
    W2e, W2o = split_even_odd(W2, C2, L1)
    b2 = np.repeat(p["conv2_b"], L1 // 2)[None, :]

    Wf1, bf1 = p["fc1_w"].T, p["fc1_b"][None, :]
    Wf2, bf2 = p["fc2_w"].T, p["fc2_b"][None, :]
    Wd1, bd1 = p["dfc1_w"].T, p["dfc1_b"][None, :]
    Wd2, bd2 = p["dfc2_w"].T, p["dfc2_b"][None, :]

    L2 = IN_LEN // 4
    Wt2, Lt2 = convT1d_matrix(p["dct2_w"], L2, 2, 2, 1)
    bt2 = np.repeat(p["dct2_b"], Lt2)[None, :]
    Wt3, Lt3 = convT1d_matrix(p["dct3_w"], Lt2, 2, 2, 1)
    bt3 = np.repeat(p["dct3_b"], Lt3)[None, :]

    mats = [
        _pad2d(W1e, P_IN, P_H1), _pad2d(W1o, P_IN, P_H1), _pad2d(b1, 1, P_H1),
        _pad2d(W2e, P_H1, P_H2), _pad2d(W2o, P_H1, P_H2), _pad2d(b2, 1, P_H2),
        _pad2d(Wf1, P_H2, P_FC1), _pad2d(bf1, 1, P_FC1),
        _pad2d(Wf2, P_FC1, P_HID), _pad2d(bf2, 1, P_HID),
        _pad2d(Wd1, P_HID, P_FC1), _pad2d(bd1, 1, P_FC1),
        _pad2d(Wd2, P_FC1, P_H6), _pad2d(bd2, 1, P_H6),
        _pad2d(Wt2, P_H6, P_H7), _pad2d(bt2, 1, P_H7),
        _pad2d(Wt3, P_H7, P_OUT), _pad2d(bt3, 1, P_OUT),
    ]
    return [jnp.asarray(m, jnp.float32) for m in mats]


# --------------------------- pure numpy reference ---------------------------
def numpy_reference(x, p):
    x = np.asarray(x, np.float32)

    def conv1d(a, w, b, pad):
        B, Ci, L = a.shape
        Co, _, Kk = w.shape
        ap = np.pad(a, ((0, 0), (0, 0), (pad, pad)))
        out = np.zeros((B, Co, L), np.float32)
        for k in range(Kk):
            out += np.einsum("oc,bcl->bol", w[:, :, k], ap[:, :, k:k + L])
        return out + b[None, :, None]

    def convT1d(a, w, b, stride, pad, opad):
        B, Ci, L = a.shape
        _, Co, Kk = w.shape
        Lo = (L - 1) * stride - 2 * pad + Kk + opad
        out = np.zeros((B, Co, Lo), np.float32)
        for i in range(L):
            for k in range(Kk):
                l = i * stride - pad + k
                if 0 <= l < Lo:
                    out[:, :, l] += a[:, :, i] @ w[:, :, k]
        return out + b[None, :, None]

    relu = lambda a: np.maximum(a, 0.0)
    pool = lambda a: a.reshape(a.shape[0], a.shape[1], a.shape[2] // 2, 2).max(-1)

    h = pool(relu(conv1d(x, p["conv1_w"], p["conv1_b"], 2)))
    h = pool(relu(conv1d(h, p["conv2_w"], p["conv2_b"], 2)))
    h = h.reshape(h.shape[0], -1)
    h = relu(h @ p["fc1_w"].T + p["fc1_b"])
    h = h @ p["fc2_w"].T + p["fc2_b"]
    h = relu(h @ p["dfc1_w"].T + p["dfc1_b"])
    h = h @ p["dfc2_w"].T + p["dfc2_b"]
    h = h.reshape(h.shape[0], C2, IN_LEN // 4)
    h = relu(convT1d(h, p["dct2_w"], p["dct2_b"], 2, 2, 1))
    h = convT1d(h, p["dct3_w"], p["dct3_b"], 2, 2, 1)
    return 1.0 / (1.0 + np.exp(-h))


if __name__ == "__main__":
    key = jax.random.PRNGKey(0)
    k_x, k_p = jax.random.split(key)

    B = 4
    x = jax.random.uniform(k_x, (B, IN_CH, IN_LEN), jnp.float32)

    raw_params = init_params(k_p)
    kernel_params = build_kernel_params(raw_params)

    y = frame_cnn_forward(x, kernel_params)
    y = jax.block_until_ready(y)

    assert y.shape == (B, IN_CH, IN_LEN)
    ref = numpy_reference(np.asarray(x), raw_params)
    np.testing.assert_allclose(np.asarray(y), ref, atol=2e-2, rtol=2e-2)

    print("KERNEL_OK")
</pallas_src>

<mosaic_0001>
module attributes {stable_mosaic.version = 11 : i64} {
  func.func @frame_cnn_kernel(%arg0: i32, %arg1: memref<8x128xf32, #tpu.memory_space<vmem>>, %arg2: memref<128x512xf32, #tpu.memory_space<vmem>>, %arg3: memref<128x512xf32, #tpu.memory_space<vmem>>, %arg4: memref<1x512xf32, #tpu.memory_space<vmem>>, %arg5: memref<512x256xf32, #tpu.memory_space<vmem>>, %arg6: memref<512x256xf32, #tpu.memory_space<vmem>>, %arg7: memref<1x256xf32, #tpu.memory_space<vmem>>, %arg8: memref<256x128xf32, #tpu.memory_space<vmem>>, %arg9: memref<1x128xf32, #tpu.memory_space<vmem>>, %arg10: memref<128x128xf32, #tpu.memory_space<vmem>>, %arg11: memref<1x128xf32, #tpu.memory_space<vmem>>, %arg12: memref<128x128xf32, #tpu.memory_space<vmem>>, %arg13: memref<1x128xf32, #tpu.memory_space<vmem>>, %arg14: memref<128x256xf32, #tpu.memory_space<vmem>>, %arg15: memref<1x256xf32, #tpu.memory_space<vmem>>, %arg16: memref<256x512xf32, #tpu.memory_space<vmem>>, %arg17: memref<1x512xf32, #tpu.memory_space<vmem>>, %arg18: memref<512x128xf32, #tpu.memory_space<vmem>>, %arg19: memref<1x128xf32, #tpu.memory_space<vmem>>, %arg20: memref<8x128xf32, #tpu.memory_space<vmem>>) attributes {dimension_semantics = [#tpu.dimension_semantics<parallel>], iteration_bounds = array<i64: 1>, scalar_prefetch = 0 : i64, scratch_operands = 0 : i64, tpu.core_type = #tpu.core_type<tc>, window_params = [{transform_indices = @transform_0, window_bounds = array<i64: 8, 128>}, {pipeline_mode = #tpu.pipeline_mode<synchronous>, transform_indices = @transform_1, window_bounds = array<i64: 128, 512>}, {pipeline_mode = #tpu.pipeline_mode<synchronous>, transform_indices = @transform_2, window_bounds = array<i64: 128, 512>}, {pipeline_mode = #tpu.pipeline_mode<synchronous>, transform_indices = @transform_3, window_bounds = array<i64: 1, 512>}, {pipeline_mode = #tpu.pipeline_mode<synchronous>, transform_indices = @transform_4, window_bounds = array<i64: 512, 256>}, {pipeline_mode = #tpu.pipeline_mode<synchronous>, transform_indices = @transform_5, window_bounds = array<i64: 512, 256>}, {pipeline_mode = #tpu.pipeline_mode<synchronous>, transform_indices = @transform_6, window_bounds = array<i64: 1, 256>}, {pipeline_mode = #tpu.pipeline_mode<synchronous>, transform_indices = @transform_7, window_bounds = array<i64: 256, 128>}, {pipeline_mode = #tpu.pipeline_mode<synchronous>, transform_indices = @transform_8, window_bounds = array<i64: 1, 128>}, {pipeline_mode = #tpu.pipeline_mode<synchronous>, transform_indices = @transform_9, window_bounds = array<i64: 128, 128>}, {pipeline_mode = #tpu.pipeline_mode<synchronous>, transform_indices = @transform_10, window_bounds = array<i64: 1, 128>}, {pipeline_mode = #tpu.pipeline_mode<synchronous>, transform_indices = @transform_11, window_bounds = array<i64: 128, 128>}, {pipeline_mode = #tpu.pipeline_mode<synchronous>, transform_indices = @transform_12, window_bounds = array<i64: 1, 128>}, {pipeline_mode = #tpu.pipeline_mode<synchronous>, transform_indices = @transform_13, window_bounds = array<i64: 128, 256>}, {pipeline_mode = #tpu.pipeline_mode<synchronous>, transform_indices = @transform_14, window_bounds = array<i64: 1, 256>}, {pipeline_mode = #tpu.pipeline_mode<synchronous>, transform_indices = @transform_15, window_bounds = array<i64: 256, 512>}, {pipeline_mode = #tpu.pipeline_mode<synchronous>, transform_indices = @transform_16, window_bounds = array<i64: 1, 512>}, {pipeline_mode = #tpu.pipeline_mode<synchronous>, transform_indices = @transform_17, window_bounds = array<i64: 512, 128>}, {pipeline_mode = #tpu.pipeline_mode<synchronous>, transform_indices = @transform_18, window_bounds = array<i64: 1, 128>}, {transform_indices = @transform_19, window_bounds = array<i64: 8, 128>}]} {
    %c0 = arith.constant 0 : index
    %c0_0 = arith.constant 0 : index
    %0 = vector.load %arg1[%c0, %c0_0] : memref<8x128xf32, #tpu.memory_space<vmem>>, vector<8x128xf32>
    %c0_1 = arith.constant 0 : index
    %c0_2 = arith.constant 0 : index
    %1 = vector.load %arg2[%c0_1, %c0_2] : memref<128x512xf32, #tpu.memory_space<vmem>>, vector<128x512xf32>
    %cst = arith.constant dense<0.000000e+00> : vector<8x512xf32>
    %2 = tpu.matmul %0, %1, %cst {dimension_numbers = #tpu.dot_dimension_numbers<[1], [0], [0], [1], [0, 0, 1, 1], [], []>} : vector<8x128xf32>, vector<128x512xf32>, vector<8x512xf32> -> vector<8x512xf32>
    %c0_3 = arith.constant 0 : index
    %c0_4 = arith.constant 0 : index
    %3 = vector.load %arg3[%c0_3, %c0_4] : memref<128x512xf32, #tpu.memory_space<vmem>>, vector<128x512xf32>
    %cst_5 = arith.constant dense<0.000000e+00> : vector<8x512xf32>
    %4 = tpu.matmul %0, %3, %cst_5 {dimension_numbers = #tpu.dot_dimension_numbers<[1], [0], [0], [1], [0, 0, 1, 1], [], []>} : vector<8x128xf32>, vector<128x512xf32>, vector<8x512xf32> -> vector<8x512xf32>
    %5 = arith.maximumf %2, %4 : vector<8x512xf32>
    %c0_6 = arith.constant 0 : index
    %c0_7 = arith.constant 0 : index
    %6 = vector.load %arg4[%c0_6, %c0_7] : memref<1x512xf32, #tpu.memory_space<vmem>>, vector<1x512xf32>
    %7 = vector.broadcast %6 : vector<1x512xf32> to vector<8x512xf32>
    %8 = arith.addf %5, %7 : vector<8x512xf32>
    %cst_8 = arith.constant 0.000000e+00 : f32
    %9 = vector.broadcast %cst_8 : f32 to vector<8x512xf32>
    %10 = arith.maximumf %8, %9 : vector<8x512xf32>
    %c0_9 = arith.constant 0 : index
    %c0_10 = arith.constant 0 : index
    %11 = vector.load %arg5[%c0_9, %c0_10] : memref<512x256xf32, #tpu.memory_space<vmem>>, vector<512x256xf32>
    %cst_11 = arith.constant dense<0.000000e+00> : vector<8x256xf32>
    %12 = tpu.matmul %10, %11, %cst_11 {dimension_numbers = #tpu.dot_dimension_numbers<[1], [0], [0], [1], [0, 0, 1, 1], [], []>} : vector<8x512xf32>, vector<512x256xf32>, vector<8x256xf32> -> vector<8x256xf32>
    %c0_12 = arith.constant 0 : index
    %c0_13 = arith.constant 0 : index
    %13 = vector.load %arg6[%c0_12, %c0_13] : memref<512x256xf32, #tpu.memory_space<vmem>>, vector<512x256xf32>
    %cst_14 = arith.constant dense<0.000000e+00> : vector<8x256xf32>
    %14 = tpu.matmul %10, %13, %cst_14 {dimension_numbers = #tpu.dot_dimension_numbers<[1], [0], [0], [1], [0, 0, 1, 1], [], []>} : vector<8x512xf32>, vector<512x256xf32>, vector<8x256xf32> -> vector<8x256xf32>
    %15 = arith.maximumf %12, %14 : vector<8x256xf32>
    %c0_15 = arith.constant 0 : index
    %c0_16 = arith.constant 0 : index
    %16 = vector.load %arg7[%c0_15, %c0_16] : memref<1x256xf32, #tpu.memory_space<vmem>>, vector<1x256xf32>
    %17 = vector.broadcast %16 : vector<1x256xf32> to vector<8x256xf32>
    %18 = arith.addf %15, %17 : vector<8x256xf32>
    %cst_17 = arith.constant 0.000000e+00 : f32
    %19 = vector.broadcast %cst_17 : f32 to vector<8x256xf32>
    %20 = arith.maximumf %18, %19 : vector<8x256xf32>
    %c0_18 = arith.constant 0 : index
    %c0_19 = arith.constant 0 : index
    %21 = vector.load %arg8[%c0_18, %c0_19] : memref<256x128xf32, #tpu.memory_space<vmem>>, vector<256x128xf32>
    %cst_20 = arith.constant dense<0.000000e+00> : vector<8x128xf32>
    %22 = tpu.matmul %20, %21, %cst_20 {dimension_numbers = #tpu.dot_dimension_numbers<[1], [0], [0], [1], [0, 0, 1, 1], [], []>} : vector<8x256xf32>, vector<256x128xf32>, vector<8x128xf32> -> vector<8x128xf32>
    %c0_21 = arith.constant 0 : index
    %c0_22 = arith.constant 0 : index
    %23 = vector.load %arg9[%c0_21, %c0_22] : memref<1x128xf32, #tpu.memory_space<vmem>>, vector<1x128xf32>
    %24 = vector.broadcast %23 : vector<1x128xf32> to vector<8x128xf32>
    %25 = arith.addf %22, %24 : vector<8x128xf32>
    %cst_23 = arith.constant 0.000000e+00 : f32
    %26 = vector.broadcast %cst_23 : f32 to vector<8x128xf32>
    %27 = arith.maximumf %25, %26 : vector<8x128xf32>
    %c0_24 = arith.constant 0 : index
    %c0_25 = arith.constant 0 : index
    %28 = vector.load %arg10[%c0_24, %c0_25] : memref<128x128xf32, #tpu.memory_space<vmem>>, vector<128x128xf32>
    %cst_26 = arith.constant dense<0.000000e+00> : vector<8x128xf32>
    %29 = tpu.matmul %27, %28, %cst_26 {dimension_numbers = #tpu.dot_dimension_numbers<[1], [0], [0], [1], [0, 0, 1, 1], [], []>} : vector<8x128xf32>, vector<128x128xf32>, vector<8x128xf32> -> vector<8x128xf32>
    %c0_27 = arith.constant 0 : index
    %c0_28 = arith.constant 0 : index
    %30 = vector.load %arg11[%c0_27, %c0_28] : memref<1x128xf32, #tpu.memory_space<vmem>>, vector<1x128xf32>
    %31 = vector.broadcast %30 : vector<1x128xf32> to vector<8x128xf32>
    %32 = arith.addf %29, %31 : vector<8x128xf32>
    %c0_29 = arith.constant 0 : index
    %c0_30 = arith.constant 0 : index
    %33 = vector.load %arg12[%c0_29, %c0_30] : memref<128x128xf32, #tpu.memory_space<vmem>>, vector<128x128xf32>
    %cst_31 = arith.constant dense<0.000000e+00> : vector<8x128xf32>
    %34 = tpu.matmul %32, %33, %cst_31 {dimension_numbers = #tpu.dot_dimension_numbers<[1], [0], [0], [1], [0, 0, 1, 1], [], []>} : vector<8x128xf32>, vector<128x128xf32>, vector<8x128xf32> -> vector<8x128xf32>
    %c0_32 = arith.constant 0 : index
    %c0_33 = arith.constant 0 : index
    %35 = vector.load %arg13[%c0_32, %c0_33] : memref<1x128xf32, #tpu.memory_space<vmem>>, vector<1x128xf32>
    %36 = vector.broadcast %35 : vector<1x128xf32> to vector<8x128xf32>
    %37 = arith.addf %34, %36 : vector<8x128xf32>
    %cst_34 = arith.constant 0.000000e+00 : f32
    %38 = vector.broadcast %cst_34 : f32 to vector<8x128xf32>
    %39 = arith.maximumf %37, %38 : vector<8x128xf32>
    %c0_35 = arith.constant 0 : index
    %c0_36 = arith.constant 0 : index
    %40 = vector.load %arg14[%c0_35, %c0_36] : memref<128x256xf32, #tpu.memory_space<vmem>>, vector<128x256xf32>
    %cst_37 = arith.constant dense<0.000000e+00> : vector<8x256xf32>
    %41 = tpu.matmul %39, %40, %cst_37 {dimension_numbers = #tpu.dot_dimension_numbers<[1], [0], [0], [1], [0, 0, 1, 1], [], []>} : vector<8x128xf32>, vector<128x256xf32>, vector<8x256xf32> -> vector<8x256xf32>
    %c0_38 = arith.constant 0 : index
    %c0_39 = arith.constant 0 : index
    %42 = vector.load %arg15[%c0_38, %c0_39] : memref<1x256xf32, #tpu.memory_space<vmem>>, vector<1x256xf32>
    %43 = vector.broadcast %42 : vector<1x256xf32> to vector<8x256xf32>
    %44 = arith.addf %41, %43 : vector<8x256xf32>
    %c0_40 = arith.constant 0 : index
    %c0_41 = arith.constant 0 : index
    %45 = vector.load %arg16[%c0_40, %c0_41] : memref<256x512xf32, #tpu.memory_space<vmem>>, vector<256x512xf32>
    %cst_42 = arith.constant dense<0.000000e+00> : vector<8x512xf32>
    %46 = tpu.matmul %44, %45, %cst_42 {dimension_numbers = #tpu.dot_dimension_numbers<[1], [0], [0], [1], [0, 0, 1, 1], [], []>} : vector<8x256xf32>, vector<256x512xf32>, vector<8x512xf32> -> vector<8x512xf32>
    %c0_43 = arith.constant 0 : index
    %c0_44 = arith.constant 0 : index
    %47 = vector.load %arg17[%c0_43, %c0_44] : memref<1x512xf32, #tpu.memory_space<vmem>>, vector<1x512xf32>
    %48 = vector.broadcast %47 : vector<1x512xf32> to vector<8x512xf32>
    %49 = arith.addf %46, %48 : vector<8x512xf32>
    %cst_45 = arith.constant 0.000000e+00 : f32
    %50 = vector.broadcast %cst_45 : f32 to vector<8x512xf32>
    %51 = arith.maximumf %49, %50 : vector<8x512xf32>
    %c0_46 = arith.constant 0 : index
    %c0_47 = arith.constant 0 : index
    %52 = vector.load %arg18[%c0_46, %c0_47] : memref<512x128xf32, #tpu.memory_space<vmem>>, vector<512x128xf32>
    %cst_48 = arith.constant dense<0.000000e+00> : vector<8x128xf32>
    %53 = tpu.matmul %51, %52, %cst_48 {dimension_numbers = #tpu.dot_dimension_numbers<[1], [0], [0], [1], [0, 0, 1, 1], [], []>} : vector<8x512xf32>, vector<512x128xf32>, vector<8x128xf32> -> vector<8x128xf32>
    %c0_49 = arith.constant 0 : index
    %c0_50 = arith.constant 0 : index
    %54 = vector.load %arg19[%c0_49, %c0_50] : memref<1x128xf32, #tpu.memory_space<vmem>>, vector<1x128xf32>
    %55 = vector.broadcast %54 : vector<1x128xf32> to vector<8x128xf32>
    %56 = arith.addf %53, %55 : vector<8x128xf32>
    %cst_51 = arith.constant 5.000000e-01 : f32
    %57 = vector.broadcast %cst_51 : f32 to vector<8x128xf32>
    %58 = arith.mulf %57, %56 : vector<8x128xf32>
    %59 = math.tanh %58 : vector<8x128xf32>
    %cst_52 = arith.constant 1.000000e+00 : f32
    %60 = vector.broadcast %cst_52 : f32 to vector<8x128xf32>
    %61 = arith.addf %59, %60 : vector<8x128xf32>
    %cst_53 = arith.constant 5.000000e-01 : f32
    %62 = vector.broadcast %cst_53 : f32 to vector<8x128xf32>
    %63 = arith.mulf %62, %61 : vector<8x128xf32>
    %c0_54 = arith.constant 0 : index
    %c0_55 = arith.constant 0 : index
    %64 = vector.load %arg20[%c0_54, %c0_55] : memref<8x128xf32, #tpu.memory_space<vmem>>, vector<8x128xf32>
    tpu.vector_store %arg20[%c0_54, %c0_55], %63 {strides = array<i32>} : memref<8x128xf32, #tpu.memory_space<vmem>>, vector<8x128xf32>,
    return
  }
  func.func @transform_0(%arg0: i32) -> (i32, i32) {
    %c0_i32 = arith.constant 0 : i32
    %c0_i32_0 = arith.constant 0 : i32
    return %arg0, %c0_i32 : i32, i32
  }
  func.func @transform_1(%arg0: i32) -> (i32, i32) {
    %c0_i32 = arith.constant 0 : i32
    %c0_i32_0 = arith.constant 0 : i32
    %c0_i32_1 = arith.constant 0 : i32
    return %c0_i32, %c0_i32_0 : i32, i32
  }
  func.func @transform_2(%arg0: i32) -> (i32, i32) {
    %c0_i32 = arith.constant 0 : i32
    %c0_i32_0 = arith.constant 0 : i32
    %c0_i32_1 = arith.constant 0 : i32
    return %c0_i32, %c0_i32_0 : i32, i32
  }
  func.func @transform_3(%arg0: i32) -> (i32, i32) {
    %c0_i32 = arith.constant 0 : i32
    %c0_i32_0 = arith.constant 0 : i32
    %c0_i32_1 = arith.constant 0 : i32
    return %c0_i32, %c0_i32_0 : i32, i32
  }
  func.func @transform_4(%arg0: i32) -> (i32, i32) {
    %c0_i32 = arith.constant 0 : i32
    %c0_i32_0 = arith.constant 0 : i32
    %c0_i32_1 = arith.constant 0 : i32
    return %c0_i32, %c0_i32_0 : i32, i32
  }
  func.func @transform_5(%arg0: i32) -> (i32, i32) {
    %c0_i32 = arith.constant 0 : i32
    %c0_i32_0 = arith.constant 0 : i32
    %c0_i32_1 = arith.constant 0 : i32
    return %c0_i32, %c0_i32_0 : i32, i32
  }
  func.func @transform_6(%arg0: i32) -> (i32, i32) {
    %c0_i32 = arith.constant 0 : i32
    %c0_i32_0 = arith.constant 0 : i32
    %c0_i32_1 = arith.constant 0 : i32
    return %c0_i32, %c0_i32_0 : i32, i32
  }
  func.func @transform_7(%arg0: i32) -> (i32, i32) {
    %c0_i32 = arith.constant 0 : i32
    %c0_i32_0 = arith.constant 0 : i32
    %c0_i32_1 = arith.constant 0 : i32
    return %c0_i32, %c0_i32_0 : i32, i32
  }
  func.func @transform_8(%arg0: i32) -> (i32, i32) {
    %c0_i32 = arith.constant 0 : i32
    %c0_i32_0 = arith.constant 0 : i32
    %c0_i32_1 = arith.constant 0 : i32
    return %c0_i32, %c0_i32_0 : i32, i32
  }
  func.func @transform_9(%arg0: i32) -> (i32, i32) {
    %c0_i32 = arith.constant 0 : i32
    %c0_i32_0 = arith.constant 0 : i32
    %c0_i32_1 = arith.constant 0 : i32
    return %c0_i32, %c0_i32_0 : i32, i32
  }
  func.func @transform_10(%arg0: i32) -> (i32, i32) {
    %c0_i32 = arith.constant 0 : i32
    %c0_i32_0 = arith.constant 0 : i32
    %c0_i32_1 = arith.constant 0 : i32
    return %c0_i32, %c0_i32_0 : i32, i32
  }
  func.func @transform_11(%arg0: i32) -> (i32, i32) {
    %c0_i32 = arith.constant 0 : i32
    %c0_i32_0 = arith.constant 0 : i32
    %c0_i32_1 = arith.constant 0 : i32
    return %c0_i32, %c0_i32_0 : i32, i32
  }
  func.func @transform_12(%arg0: i32) -> (i32, i32) {
    %c0_i32 = arith.constant 0 : i32
    %c0_i32_0 = arith.constant 0 : i32
    %c0_i32_1 = arith.constant 0 : i32
    return %c0_i32, %c0_i32_0 : i32, i32
  }
  func.func @transform_13(%arg0: i32) -> (i32, i32) {
    %c0_i32 = arith.constant 0 : i32
    %c0_i32_0 = arith.constant 0 : i32
    %c0_i32_1 = arith.constant 0 : i32
    return %c0_i32, %c0_i32_0 : i32, i32
  }
  func.func @transform_14(%arg0: i32) -> (i32, i32) {
    %c0_i32 = arith.constant 0 : i32
    %c0_i32_0 = arith.constant 0 : i32
    %c0_i32_1 = arith.constant 0 : i32
    return %c0_i32, %c0_i32_0 : i32, i32
  }
  func.func @transform_15(%arg0: i32) -> (i32, i32) {
    %c0_i32 = arith.constant 0 : i32
    %c0_i32_0 = arith.constant 0 : i32
    %c0_i32_1 = arith.constant 0 : i32
    return %c0_i32, %c0_i32_0 : i32, i32
  }
  func.func @transform_16(%arg0: i32) -> (i32, i32) {
    %c0_i32 = arith.constant 0 : i32
    %c0_i32_0 = arith.constant 0 : i32
    %c0_i32_1 = arith.constant 0 : i32
    return %c0_i32, %c0_i32_0 : i32, i32
  }
  func.func @transform_17(%arg0: i32) -> (i32, i32) {
    %c0_i32 = arith.constant 0 : i32
    %c0_i32_0 = arith.constant 0 : i32
    %c0_i32_1 = arith.constant 0 : i32
    return %c0_i32, %c0_i32_0 : i32, i32
  }
  func.func @transform_18(%arg0: i32) -> (i32, i32) {
    %c0_i32 = arith.constant 0 : i32
    %c0_i32_0 = arith.constant 0 : i32
    %c0_i32_1 = arith.constant 0 : i32
    return %c0_i32, %c0_i32_0 : i32, i32
  }
  func.func @transform_19(%arg0: i32) -> (i32, i32) {
    %c0_i32 = arith.constant 0 : i32
    %c0_i32_0 = arith.constant 0 : i32
    return %arg0, %c0_i32 : i32, i32
  }
}

</mosaic_0001>

<llo_original>
// kernel: tpu_custom_call.1
$region0: #{tpu_custom_call.1}
  #allocation0 [shape = 'u32[]', space=smem, size = 0x4, offset = 0x4, fixed_abs, tag = 'smem constant byte address 0x4 - core index']
  #allocation1 [shape = 'u32[144,128]{1,0:T(1,128)}', space=vmem, size = 0x12000, scoped, tag = 'internal scratch']
  %s0 = inlined_call_operand.hbm [shape: f32[8,128], index: 0, kind: input, shape index: {}]
  %s1 = inlined_call_operand.hbm [shape: f32[128,512], index: 1, kind: input, shape index: {}]
  %s2 = inlined_call_operand.hbm [shape: f32[128,512], index: 2, kind: input, shape index: {}]
  %s3 = inlined_call_operand.vmem [shape: f32[1,512], index: 3, kind: input, shape index: {}]
  %s4 = inlined_call_operand.hbm [shape: f32[512,256], index: 4, kind: input, shape index: {}]
  %s5 = inlined_call_operand.hbm [shape: f32[512,256], index: 5, kind: input, shape index: {}]
  %s6 = inlined_call_operand.vmem [shape: f32[1,256], index: 6, kind: input, shape index: {}]
  %s7 = inlined_call_operand.hbm [shape: f32[256,128], index: 7, kind: input, shape index: {}]
  %s8 = inlined_call_operand.vmem [shape: f32[1,128], index: 8, kind: input, shape index: {}]
  %s9 = inlined_call_operand.hbm [shape: f32[128,128], index: 9, kind: input, shape index: {}]
  %s10 = inlined_call_operand.vmem [shape: f32[1,128], index: 10, kind: input, shape index: {}]
  %s11 = inlined_call_operand.hbm [shape: f32[128,128], index: 11, kind: input, shape index: {}]
  %s12 = inlined_call_operand.vmem [shape: f32[1,128], index: 12, kind: input, shape index: {}]
  %s13 = inlined_call_operand.hbm [shape: f32[128,256], index: 13, kind: input, shape index: {}]
  %s14 = inlined_call_operand.vmem [shape: f32[1,256], index: 14, kind: input, shape index: {}]
  %s15 = inlined_call_operand.hbm [shape: f32[256,512], index: 15, kind: input, shape index: {}]
  %s16 = inlined_call_operand.vmem [shape: f32[1,512], index: 16, kind: input, shape index: {}]
  %s17 = inlined_call_operand.hbm [shape: f32[512,128], index: 17, kind: input, shape index: {}]
  %s18 = inlined_call_operand.vmem [shape: f32[1,128], index: 18, kind: input, shape index: {}]
  %s19 = inlined_call_operand.hbm [shape: f32[8,128], index: 19, kind: output, shape index: {}]
  %s20 = sld [smem:[#allocation0]]
  $region130: #{tpu_custom_call.1} parent=0
    _
  %s22 = ssub.s32 1, %s20
  %s23 = scalar_select 0, %s22, %s20
  $region1: #{tpu_custom_call.1} parent=0
    #allocation2 [shape = 'u8[4096]{0}', space=vmem, size = 0x1000, scoped, tag = 'input window, operand 0, single buffered']
    #allocation3 [shape = 's32[1]{0}', space=sflag, size = 0x4, scoped, tag = 'scoped memory for tpu_custom_call.1']
    #allocation4 [shape = 's32[1]{0}', space=sflag, size = 0x4, scoped, tag = 'scoped memory for tpu_custom_call.1']
    #allocation5 [shape = 'u8[262144]{0}', space=vmem, size = 0x40000, scoped, tag = 'input window, operand 1, single buffered']
    #allocation6 [shape = 's32[1]{0}', space=sflag, size = 0x4, scoped, tag = 'scoped memory for tpu_custom_call.1']
    #allocation7 [shape = 'u8[262144]{0}', space=vmem, size = 0x40000, scoped, tag = 'input window, operand 2, single buffered']
    #allocation8 [shape = 'u8[524288]{0}', space=vmem, size = 0x80000, scoped, tag = 'input window, operand 4, single buffered']
    #allocation9 [shape = 's32[1]{0}', space=sflag, size = 0x4, scoped, tag = 'scoped memory for tpu_custom_call.1']
    #allocation10 [shape = 'u8[524288]{0}', space=vmem, size = 0x80000, scoped, tag = 'input window, operand 5, single buffered']
    #allocation11 [shape = 'u8[131072]{0}', space=vmem, size = 0x20000, scoped, tag = 'input window, operand 7, single buffered']
    #allocation12 [shape = 's32[1]{0}', space=sflag, size = 0x4, scoped, tag = 'scoped memory for tpu_custom_call.1']
    #allocation13 [shape = 'u8[65536]{0}', space=vmem, size = 0x10000, scoped, tag = 'input window, operand 9, single buffered']
    #allocation14 [shape = 'u8[65536]{0}', space=vmem, size = 0x10000, scoped, tag = 'input window, operand 11, single buffered']
    #allocation15 [shape = 's32[1]{0}', space=sflag, size = 0x4, scoped, tag = 'scoped memory for tpu_custom_call.1']
    #allocation16 [shape = 'u8[131072]{0}', space=vmem, size = 0x20000, scoped, tag = 'input window, operand 13, single buffered']
    #allocation17 [shape = 'u8[524288]{0}', space=vmem, size = 0x80000, scoped, tag = 'input window, operand 15, single buffered']
    #allocation18 [shape = 's32[1]{0}', space=sflag, size = 0x4, scoped, tag = 'scoped memory for tpu_custom_call.1']
    #allocation19 [shape = 'u8[262144]{0}', space=vmem, size = 0x40000, scoped, tag = 'input window, operand 17, single buffered']
    #allocation20 [shape = 'u8[4096]{0}', space=vmem, size = 0x1000, scoped, tag = 'output window, operand 0, single buffered']
    %24 = vsyncpa [#allocation3], 0
    %25 = vsyncpa [#allocation6], 0
    %26 = vsyncpa [#allocation9], 0
    %27 = vsyncpa [#allocation12], 0
    %28 = vsyncpa [#allocation15], 0
    %29 = vsyncpa [#allocation18], 0
    %30 = vsyncpa [#allocation4], 0
    // Predicated region
    $region2: #{tpu_custom_call.1} parent=1 // pred_check
      _
    $region3: #{tpu_custom_call.1} parent=1 // pred_check_branch
      %32 = sbr.rel (0) target = $region5
    $region4: #{tpu_custom_call.1} parent=1 // pred_region
      %s34 = ssub.s32 128, 128
      %35 = vsyncadd [#allocation3], %s34
      %s37 = sshll.u32 [#allocation2], 4
      %s38 = int_to_ptr.vmem [resolvable:$true] %s37
      %40 = dma.hbm_to_vmem [thread:$0]  %s0, 128, %s38, [#allocation3]
    $region5: #{tpu_custom_call.1} parent=1 // pred_fallthru
      _
    // Predicated region
    $region6: #{tpu_custom_call.1} parent=1 // pred_check
      _
    $region7: #{tpu_custom_call.1} parent=1 // pred_check_branch
      %42 = sbr.rel (0) target = $region9
    $region8: #{tpu_custom_call.1} parent=1 // pred_region
      %s44 = ssub.s32 8192, 8192
      %45 = vsyncadd [#allocation6], %s44
      %s46 = sshll.u32 [#allocation5], 4
      %s47 = int_to_ptr.vmem [resolvable:$true] %s46
      %52 = dma.hbm_to_vmem [thread:$0]  %s1, 8192, %s47, [#allocation6], 512, 512, 32
    $region9: #{tpu_custom_call.1} parent=1 // pred_fallthru
      _
    // Predicated region
    $region10: #{tpu_custom_call.1} parent=1 // pred_check
      _
    $region11: #{tpu_custom_call.1} parent=1 // pred_check_branch
      %54 = sbr.rel (0) target = $region13
    $region12: #{tpu_custom_call.1} parent=1 // pred_region
      %s56 = ssub.s32 8192, 8192
      %57 = vsyncadd [#allocation6], %s56
      %s58 = sshll.u32 [#allocation7], 4
      %s59 = int_to_ptr.vmem [resolvable:$true] %s58
      %64 = dma.hbm_to_vmem [thread:$0]  %s2, 8192, %s59, [#allocation6], 512, 512, 32
    $region13: #{tpu_custom_call.1} parent=1 // pred_fallthru
      _
    // Predicated region
    $region14: #{tpu_custom_call.1} parent=1 // pred_check
      _
    $region15: #{tpu_custom_call.1} parent=1 // pred_check_branch
      %66 = sbr.rel (0) target = $region17
    $region16: #{tpu_custom_call.1} parent=1 // pred_region
      _
    $region17: #{tpu_custom_call.1} parent=1 // pred_fallthru
      _
    // Predicated region
    $region18: #{tpu_custom_call.1} parent=1 // pred_check
      _
    $region19: #{tpu_custom_call.1} parent=1 // pred_check_branch
      %68 = sbr.rel (0) target = $region21
    $region20: #{tpu_custom_call.1} parent=1 // pred_region
      %s70 = ssub.s32 16384, 16384
      %71 = vsyncadd [#allocation9], %s70
      %s72 = sshll.u32 [#allocation8], 4
      %s73 = int_to_ptr.vmem [resolvable:$true] %s72
      %78 = dma.hbm_to_vmem [thread:$0]  %s4, 16384, %s73, [#allocation9], 256, 256, 16
    $region21: #{tpu_custom_call.1} parent=1 // pred_fallthru
      _
    // Predicated region
    $region22: #{tpu_custom_call.1} parent=1 // pred_check
      _
    $region23: #{tpu_custom_call.1} parent=1 // pred_check_branch
      %80 = sbr.rel (0) target = $region25
    $region24: #{tpu_custom_call.1} parent=1 // pred_region
      %s82 = ssub.s32 16384, 16384
      %83 = vsyncadd [#allocation9], %s82
      %s84 = sshll.u32 [#allocation10], 4
      %s85 = int_to_ptr.vmem [resolvable:$true] %s84
      %90 = dma.hbm_to_vmem [thread:$0]  %s5, 16384, %s85, [#allocation9], 256, 256, 16
    $region25: #{tpu_custom_call.1} parent=1 // pred_fallthru
      _
    // Predicated region
    $region26: #{tpu_custom_call.1} parent=1 // pred_check
      _
    $region27: #{tpu_custom_call.1} parent=1 // pred_check_branch
      %92 = sbr.rel (0) target = $region29
    $region28: #{tpu_custom_call.1} parent=1 // pred_region
      _
    $region29: #{tpu_custom_call.1} parent=1 // pred_fallthru
      _
    // Predicated region
    $region30: #{tpu_custom_call.1} parent=1 // pred_check
      _
    $region31: #{tpu_custom_call.1} parent=1 // pred_check_branch
      %94 = sbr.rel (0) target = $region33
    $region32: #{tpu_custom_call.1} parent=1 // pred_region
      %s96 = ssub.s32 4096, 4096
      %97 = vsyncadd [#allocation12], %s96
      %s98 = sshll.u32 [#allocation11], 4
      %s99 = int_to_ptr.vmem [resolvable:$true] %s98
      %104 = dma.hbm_to_vmem [thread:$0]  %s7, 4096, %s99, [#allocation12], 128, 128, 8
    $region33: #{tpu_custom_call.1} parent=1 // pred_fallthru
      _
    // Predicated region
    $region34: #{tpu_custom_call.1} parent=1 // pred_check
      _
    $region35: #{tpu_custom_call.1} parent=1 // pred_check_branch
      %106 = sbr.rel (0) target = $region37
    $region36: #{tpu_custom_call.1} parent=1 // pred_region
      _
    $region37: #{tpu_custom_call.1} parent=1 // pred_fallthru
      _
    // Predicated region
    $region38: #{tpu_custom_call.1} parent=1 // pred_check
      _
    $region39: #{tpu_custom_call.1} parent=1 // pred_check_branch
      %108 = sbr.rel (0) target = $region41
    $region40: #{tpu_custom_call.1} parent=1 // pred_region
      %s110 = ssub.s32 2048, 2048
      %111 = vsyncadd [#allocation12], %s110
      %s112 = sshll.u32 [#allocation13], 4
      %s113 = int_to_ptr.vmem [resolvable:$true] %s112
      %118 = dma.hbm_to_vmem [thread:$0]  %s9, 2048, %s113, [#allocation12], 128, 128, 8
    $region41: #{tpu_custom_call.1} parent=1 // pred_fallthru
      _
    // Predicated region
    $region42: #{tpu_custom_call.1} parent=1 // pred_check
      _
    $region43: #{tpu_custom_call.1} parent=1 // pred_check_branch
      %120 = sbr.rel (0) target = $region45
    $region44: #{tpu_custom_call.1} parent=1 // pred_region
      _
    $region45: #{tpu_custom_call.1} parent=1 // pred_fallthru
      _
    // Predicated region
    $region46: #{tpu_custom_call.1} parent=1 // pred_check
      _
    $region47: #{tpu_custom_call.1} parent=1 // pred_check_branch
      %122 = sbr.rel (0) target = $region49
    $region48: #{tpu_custom_call.1} parent=1 // pred_region
      %s124 = ssub.s32 2048, 2048
      %125 = vsyncadd [#allocation15], %s124
      %s126 = sshll.u32 [#allocation14], 4
      %s127 = int_to_ptr.vmem [resolvable:$true] %s126
      %132 = dma.hbm_to_vmem [thread:$0]  %s11, 2048, %s127, [#allocation15], 128, 128, 8
    $region49: #{tpu_custom_call.1} parent=1 // pred_fallthru
      _
    // Predicated region
    $region50: #{tpu_custom_call.1} parent=1 // pred_check
      _
    $region51: #{tpu_custom_call.1} parent=1 // pred_check_branch
      %134 = sbr.rel (0) target = $region53
    $region52: #{tpu_custom_call.1} parent=1 // pred_region
      _
    $region53: #{tpu_custom_call.1} parent=1 // pred_fallthru
      _
    // Predicated region
    $region54: #{tpu_custom_call.1} parent=1 // pred_check
      _
    $region55: #{tpu_custom_call.1} parent=1 // pred_check_branch
      %136 = sbr.rel (0) target = $region57
    $region56: #{tpu_custom_call.1} parent=1 // pred_region
      %s138 = ssub.s32 4096, 4096
      %139 = vsyncadd [#allocation15], %s138
      %s140 = sshll.u32 [#allocation16], 4
      %s141 = int_to_ptr.vmem [resolvable:$true] %s140
      %146 = dma.hbm_to_vmem [thread:$0]  %s13, 4096, %s141, [#allocation15], 256, 256, 16
    $region57: #{tpu_custom_call.1} parent=1 // pred_fallthru
      _
    // Predicated region
    $region58: #{tpu_custom_call.1} parent=1 // pred_check
      _
    $region59: #{tpu_custom_call.1} parent=1 // pred_check_branch
      %148 = sbr.rel (0) target = $region61
    $region60: #{tpu_custom_call.1} parent=1 // pred_region
      _
    $region61: #{tpu_custom_call.1} parent=1 // pred_fallthru
      _
    // Predicated region
    $region62: #{tpu_custom_call.1} parent=1 // pred_check
      _
    $region63: #{tpu_custom_call.1} parent=1 // pred_check_branch
      %150 = sbr.rel (0) target = $region65
    $region64: #{tpu_custom_call.1} parent=1 // pred_region
      %s152 = ssub.s32 16384, 16384
      %153 = vsyncadd [#allocation18], %s152
      %s154 = sshll.u32 [#allocation17], 4
      %s155 = int_to_ptr.vmem [resolvable:$true] %s154
      %160 = dma.hbm_to_vmem [thread:$0]  %s15, 16384, %s155, [#allocation18], 512, 512, 32
    $region65: #{tpu_custom_call.1} parent=1 // pred_fallthru
      _
    // Predicated region
    $region66: #{tpu_custom_call.1} parent=1 // pred_check
      _
    $region67: #{tpu_custom_call.1} parent=1 // pred_check_branch
      %162 = sbr.rel (0) target = $region69
    $region68: #{tpu_custom_call.1} parent=1 // pred_region
      _
    $region69: #{tpu_custom_call.1} parent=1 // pred_fallthru
      _
    // Predicated region
    $region70: #{tpu_custom_call.1} parent=1 // pred_check
      _
    $region71: #{tpu_custom_call.1} parent=1 // pred_check_branch
      %164 = sbr.rel (0) target = $region73
    $region72: #{tpu_custom_call.1} parent=1 // pred_region
      %s166 = ssub.s32 8192, 8192
      %167 = vsyncadd [#allocation18], %s166
      %s168 = sshll.u32 [#allocation19], 4
      %s169 = int_to_ptr.vmem [resolvable:$true] %s168
      %174 = dma.hbm_to_vmem [thread:$0]  %s17, 8192, %s169, [#allocation18], 128, 128, 8
    $region73: #{tpu_custom_call.1} parent=1 // pred_fallthru
      _
    // Predicated region
    $region74: #{tpu_custom_call.1} parent=1 // pred_check
      _
    $region75: #{tpu_custom_call.1} parent=1 // pred_check_branch
      %176 = sbr.rel (0) target = $region77
    $region76: #{tpu_custom_call.1} parent=1 // pred_region
      _
    $region77: #{tpu_custom_call.1} parent=1 // pred_fallthru
      _
    // Predicated region
    $region78: #{tpu_custom_call.1} parent=1 // pred_check
      _
    $region79: #{tpu_custom_call.1} parent=1 // pred_check_branch
      %178 = sbr.rel (0) target = $region81
    $region80: #{tpu_custom_call.1} parent=1 // pred_region
      %179 = dma.done [#allocation3], 128
    $region81: #{tpu_custom_call.1} parent=1 // pred_fallthru
      _
    // Predicated region
    $region82: #{tpu_custom_call.1} parent=1 // pred_check
      _
    $region83: #{tpu_custom_call.1} parent=1 // pred_check_branch
      %181 = sbr.rel (0) target = $region85
    $region84: #{tpu_custom_call.1} parent=1 // pred_region
      %182 = dma.done [#allocation6], 8192
    $region85: #{tpu_custom_call.1} parent=1 // pred_fallthru
      _
    // Predicated region
    $region86: #{tpu_custom_call.1} parent=1 // pred_check
      _
    $region87: #{tpu_custom_call.1} parent=1 // pred_check_branch
      %184 = sbr.rel (0) target = $region89
    $region88: #{tpu_custom_call.1} parent=1 // pred_region
      %185 = dma.done [#allocation6], 8192
    $region89: #{tpu_custom_call.1} parent=1 // pred_fallthru
      _
    // Predicated region
    $region90: #{tpu_custom_call.1} parent=1 // pred_check
      _
    $region91: #{tpu_custom_call.1} parent=1 // pred_check_branch
      %187 = sbr.rel (0) target = $region93
    $region92: #{tpu_custom_call.1} parent=1 // pred_region
      %188 = dma.done [#allocation9], 16384
    $region93: #{tpu_custom_call.1} parent=1 // pred_fallthru
      _
    // Predicated region
    $region94: #{tpu_custom_call.1} parent=1 // pred_check
      _
    $region95: #{tpu_custom_call.1} parent=1 // pred_check_branch
      %190 = sbr.rel (0) target = $region97
    $region96: #{tpu_custom_call.1} parent=1 // pred_region
      %191 = dma.done [#allocation9], 16384
    $region97: #{tpu_custom_call.1} parent=1 // pred_fallthru
      _
    // Predicated region
    $region98: #{tpu_custom_call.1} parent=1 // pred_check
      _
    $region99: #{tpu_custom_call.1} parent=1 // pred_check_branch
      %193 = sbr.rel (0) target = $region101
    $region100: #{tpu_custom_call.1} parent=1 // pred_region
      %194 = dma.done [#allocation12], 4096
    $region101: #{tpu_custom_call.1} parent=1 // pred_fallthru
      _
    // Predicated region
    $region102: #{tpu_custom_call.1} parent=1 // pred_check
      _
    $region103: #{tpu_custom_call.1} parent=1 // pred_check_branch
      %196 = sbr.rel (0) target = $region105
    $region104: #{tpu_custom_call.1} parent=1 // pred_region
      %197 = dma.done [#allocation12], 2048
    $region105: #{tpu_custom_call.1} parent=1 // pred_fallthru
      _
    // Predicated region
    $region106: #{tpu_custom_call.1} parent=1 // pred_check
      _
    $region107: #{tpu_custom_call.1} parent=1 // pred_check_branch
      %199 = sbr.rel (0) target = $region109
    $region108: #{tpu_custom_call.1} parent=1 // pred_region
      %200 = dma.done [#allocation15], 2048
    $region109: #{tpu_custom_call.1} parent=1 // pred_fallthru
      _
    // Predicated region
    $region110: #{tpu_custom_call.1} parent=1 // pred_check
      _
    $region111: #{tpu_custom_call.1} parent=1 // pred_check_branch
      %202 = sbr.rel (0) target = $region113
    $region112: #{tpu_custom_call.1} parent=1 // pred_region
      %203 = dma.done [#allocation15], 4096
    $region113: #{tpu_custom_call.1} parent=1 // pred_fallthru
      _
    // Predicated region
    $region114: #{tpu_custom_call.1} parent=1 // pred_check
      _
    $region115: #{tpu_custom_call.1} parent=1 // pred_check_branch
      %205 = sbr.rel (0) target = $region117
    $region116: #{tpu_custom_call.1} parent=1 // pred_region
      %206 = dma.done [#allocation18], 16384
    $region117: #{tpu_custom_call.1} parent=1 // pred_fallthru
      _
    // Predicated region
    $region118: #{tpu_custom_call.1} parent=1 // pred_check
      _
    $region119: #{tpu_custom_call.1} parent=1 // pred_check_branch
      %208 = sbr.rel (0) target = $region121
    $region120: #{tpu_custom_call.1} parent=1 // pred_region
      %209 = dma.done [#allocation18], 8192
    $region121: #{tpu_custom_call.1} parent=1 // pred_fallthru
      _
    %v210 = vld [vmem:[#allocation2] sm:$0xff]
    %v211 = vld [vmem:[#allocation5] sm:$0xff]
    %v212 = vld [vmem:[#allocation5 + $0x8] sm:$0xff]
    %v213 = vld [vmem:[#allocation5 + $0x10] sm:$0xff]
    %v214 = vld [vmem:[#allocation5 + $0x18] sm:$0xff]
    %v215 = vld [vmem:[#allocation5 + $0x20] sm:$0xff]
    %v216 = vld [vmem:[#allocation5 + $0x28] sm:$0xff]
    %v217 = vld [vmem:[#allocation5 + $0x30] sm:$0xff]
    %v218 = vld [vmem:[#allocation5 + $0x38] sm:$0xff]
    %v219 = vld [vmem:[#allocation5 + $0x40] sm:$0xff]
    %v220 = vld [vmem:[#allocation5 + $0x48] sm:$0xff]
    %v221 = vld [vmem:[#allocation5 + $0x50] sm:$0xff]
    %v222 = vld [vmem:[#allocation5 + $0x58] sm:$0xff]
    %v223 = vld [vmem:[#allocation5 + $0x60] sm:$0xff]
    %v224 = vld [vmem:[#allocation5 + $0x68] sm:$0xff]
    %v225 = vld [vmem:[#allocation5 + $0x70] sm:$0xff]
    %v226 = vld [vmem:[#allocation5 + $0x78] sm:$0xff]
    %v227 = vld [vmem:[#allocation5 + $0x80] sm:$0xff]
    %v228 = vld [vmem:[#allocation5 + $0x88] sm:$0xff]
    %v229 = vld [vmem:[#allocation5 + $0x90] sm:$0xff]
    %v230 = vld [vmem:[#allocation5 + $0x98] sm:$0xff]
    %v231 = vld [vmem:[#allocation5 + $0xa0] sm:$0xff]
    %v232 = vld [vmem:[#allocation5 + $0xa8] sm:$0xff]
    %v233 = vld [vmem:[#allocation5 + $0xb0] sm:$0xff]
    %v234 = vld [vmem:[#allocation5 + $0xb8] sm:$0xff]
    %v235 = vld [vmem:[#allocation5 + $0xc0] sm:$0xff]
    %v236 = vld [vmem:[#allocation5 + $0xc8] sm:$0xff]
    %v237 = vld [vmem:[#allocation5 + $0xd0] sm:$0xff]
    %v238 = vld [vmem:[#allocation5 + $0xd8] sm:$0xff]
    %v239 = vld [vmem:[#allocation5 + $0xe0] sm:$0xff]
    %v240 = vld [vmem:[#allocation5 + $0xe8] sm:$0xff]
    %v241 = vld [vmem:[#allocation5 + $0xf0] sm:$0xff]
    %v242 = vld [vmem:[#allocation5 + $0xf8] sm:$0xff]
    %v243 = vld [vmem:[#allocation5 + $0x100] sm:$0xff]
    %v244 = vld [vmem:[#allocation5 + $0x108] sm:$0xff]
    %v245 = vld [vmem:[#allocation5 + $0x110] sm:$0xff]
    %v246 = vld [vmem:[#allocation5 + $0x118] sm:$0xff]
    %v247 = vld [vmem:[#allocation5 + $0x120] sm:$0xff]
    %v248 = vld [vmem:[#allocation5 + $0x128] sm:$0xff]
    %v249 = vld [vmem:[#allocation5 + $0x130] sm:$0xff]
    %v250 = vld [vmem:[#allocation5 + $0x138] sm:$0xff]
    %v251 = vld [vmem:[#allocation5 + $0x140] sm:$0xff]
    %v252 = vld [vmem:[#allocation5 + $0x148] sm:$0xff]
    %v253 = vld [vmem:[#allocation5 + $0x150] sm:$0xff]
    %v254 = vld [vmem:[#allocation5 + $0x158] sm:$0xff]
    %v255 = vld [vmem:[#allocation5 + $0x160] sm:$0xff]
    %v256 = vld [vmem:[#allocation5 + $0x168] sm:$0xff]
    %v257 = vld [vmem:[#allocation5 + $0x170] sm:$0xff]
    %v258 = vld [vmem:[#allocation5 + $0x178] sm:$0xff]
    %v259 = vld [vmem:[#allocation5 + $0x180] sm:$0xff]
    %v260 = vld [vmem:[#allocation5 + $0x188] sm:$0xff]
    %v261 = vld [vmem:[#allocation5 + $0x190] sm:$0xff]
    %v262 = vld [vmem:[#allocation5 + $0x198] sm:$0xff]
    %v263 = vld [vmem:[#allocation5 + $0x1a0] sm:$0xff]
    %v264 = vld [vmem:[#allocation5 + $0x1a8] sm:$0xff]
    %v265 = vld [vmem:[#allocation5 + $0x1b0] sm:$0xff]
    %v266 = vld [vmem:[#allocation5 + $0x1b8] sm:$0xff]
    %v267 = vld [vmem:[#allocation5 + $0x1c0] sm:$0xff]
    %v268 = vld [vmem:[#allocation5 + $0x1c8] sm:$0xff]
    %v269 = vld [vmem:[#allocation5 + $0x1d0] sm:$0xff]
    %v270 = vld [vmem:[#allocation5 + $0x1d8] sm:$0xff]
    %v271 = vld [vmem:[#allocation5 + $0x1e0] sm:$0xff]
    %v272 = vld [vmem:[#allocation5 + $0x1e8] sm:$0xff]
    %v273 = vld [vmem:[#allocation5 + $0x1f0] sm:$0xff]
    %v274 = vld [vmem:[#allocation5 + $0x1f8] sm:$0xff]
    %275 = vmatprep.subr.mxu0 %v272
    %276 = vmatpush1.msra.mxu0 %v271
    %277 = vmatprep.subr.mxu0 %v268
    %278 = vmatpush1.msra.mxu0 %v267
    %279 = vmatprep.subr.mxu0 %v264
    %280 = vmatpush1.msra.mxu0 %v263
    %281 = vmatprep.subr.mxu0 %v260
    %282 = vmatpush1.msra.mxu0 %v259
    %283 = vmatprep.subr.mxu0 %v256
    %284 = vmatpush1.msra.mxu0 %v255
    %285 = vmatprep.subr.mxu0 %v252
    %286 = vmatpush1.msra.mxu0 %v251
    %287 = vmatprep.subr.mxu0 %v248
    %288 = vmatpush1.msra.mxu0 %v247
    %289 = vmatprep.subr.mxu0 %v244
    %290 = vmatpush1.msra.mxu0 %v243
    %291 = vmatprep.subr.mxu0 %v240
    %292 = vmatpush1.msra.mxu0 %v239
    %293 = vmatprep.subr.mxu0 %v236
    %294 = vmatpush1.msra.mxu0 %v235
    %295 = vmatprep.subr.mxu0 %v232
    %296 = vmatpush1.msra.mxu0 %v231
    %297 = vmatprep.subr.mxu0 %v228
    %298 = vmatpush1.msra.mxu0 %v227
    %299 = vmatprep.subr.mxu0 %v224
    %300 = vmatpush1.msra.mxu0 %v223
    %301 = vmatprep.subr.mxu0 %v220
    %302 = vmatpush1.msra.mxu0 %v219
    %303 = vmatprep.subr.mxu0 %v216
    %304 = vmatpush1.msra.mxu0 %v215
    %305 = vmatprep.subr.mxu0 %v212
    %306 = vmatpush1.msra.mxu0 %v211
    %307 = vmatprep.subr.mxu0 0.0
    %308 = vmatpush2.msra.mxu0 0.0
    %309 = vmatprep.subr.mxu0 0.0
    %310 = vmatpush2.msra.mxu0 0.0
    %311 = vmatprep.subr.mxu0 0.0
    %312 = vmatpush2.msra.mxu0 0.0
    %313 = vmatprep.subr.mxu0 0.0
    %314 = vmatpush2.msra.mxu0 0.0
    %315 = vmatprep.subr.mxu0 0.0
    %316 = vmatpush2.msra.mxu0 0.0
    %317 = vmatprep.subr.mxu0 0.0
    %318 = vmatpush2.msra.mxu0 0.0
    %319 = vmatprep.subr.mxu0 0.0
    %320 = vmatpush2.msra.mxu0 0.0
    %321 = vmatprep.subr.mxu0 0.0
    %322 = vmatpush2.msra.mxu0 0.0
    %323 = vmatprep.subr.mxu0 0.0
    %324 = vmatpush2.msra.mxu0 0.0
    %325 = vmatprep.subr.mxu0 0.0
    %326 = vmatpush2.msra.mxu0 0.0
    %327 = vmatprep.subr.mxu0 0.0
    %328 = vmatpush2.msra.mxu0 0.0
    %329 = vmatprep.subr.mxu0 0.0
    %330 = vmatpush2.msra.mxu0 0.0
    %331 = vmatprep.subr.mxu0 0.0
    %332 = vmatpush2.msra.mxu0 0.0
    %333 = vmatprep.subr.mxu0 0.0
    %334 = vmatpush2.msra.mxu0 0.0
    %335 = vmatprep.subr.mxu0 0.0
    %336 = vmatpush2.msra.mxu0 0.0
    %337 = vmatprep.subr.mxu0 0.0
    %338 = vmatpush2.msra.mxu0 0.0
    %339 = vmatprep.mubr.f32.mxu0 0.0
    %340 = vmatmul.mubr.f32.gmra.mxu0 %v210
    %v341 = vpop.f32.mrf.mxu0
    %v342 = vadd.f32 0.0, %v341
    %v343 = vpop.f32.mrf.mxu0
    %v344 = vadd.f32 0.0, %v343
    %345 = vdwg.mxu0
    %346 = vmatprep.subr.mxu0 %v274
    %347 = vmatpush1.msra.mxu0 %v273
    %348 = vmatprep.subr.mxu0 %v270
    %349 = vmatpush1.msra.mxu0 %v269
    %350 = vmatprep.subr.mxu0 %v266
    %351 = vmatpush1.msra.mxu0 %v265
    %352 = vmatprep.subr.mxu0 %v262
    %353 = vmatpush1.msra.mxu0 %v261
    %354 = vmatprep.subr.mxu0 %v258
    %355 = vmatpush1.msra.mxu0 %v257
    %356 = vmatprep.subr.mxu0 %v254
    %357 = vmatpush1.msra.mxu0 %v253
    %358 = vmatprep.subr.mxu0 %v250
    %359 = vmatpush1.msra.mxu0 %v249
    %360 = vmatprep.subr.mxu0 %v246
    %361 = vmatpush1.msra.mxu0 %v245
    %362 = vmatprep.subr.mxu0 %v242
    %363 = vmatpush1.msra.mxu0 %v241
    %364 = vmatprep.subr.mxu0 %v238
    %365 = vmatpush1.msra.mxu0 %v237
    %366 = vmatprep.subr.mxu0 %v234
    %367 = vmatpush1.msra.mxu0 %v233
    %368 = vmatprep.subr.mxu0 %v230
    %369 = vmatpush1.msra.mxu0 %v229
    %370 = vmatprep.subr.mxu0 %v226
    %371 = vmatpush1.msra.mxu0 %v225
    %372 = vmatprep.subr.mxu0 %v222
    %373 = vmatpush1.msra.mxu0 %v221
    %374 = vmatprep.subr.mxu0 %v218
    %375 = vmatpush1.msra.mxu0 %v217
    %376 = vmatprep.subr.mxu0 %v214
    %377 = vmatpush1.msra.mxu0 %v213
    %378 = vmatprep.subr.mxu0 0.0
    %379 = vmatpush2.msra.mxu0 0.0
    %380 = vmatprep.subr.mxu0 0.0
    %381 = vmatpush2.msra.mxu0 0.0
    %382 = vmatprep.subr.mxu0 0.0
    %383 = vmatpush2.msra.mxu0 0.0
    %384 = vmatprep.subr.mxu0 0.0
    %385 = vmatpush2.msra.mxu0 0.0
    %386 = vmatprep.subr.mxu0 0.0
    %387 = vmatpush2.msra.mxu0 0.0
    %388 = vmatprep.subr.mxu0 0.0
    %389 = vmatpush2.msra.mxu0 0.0
    %390 = vmatprep.subr.mxu0 0.0
    %391 = vmatpush2.msra.mxu0 0.0
    %392 = vmatprep.subr.mxu0 0.0
    %393 = vmatpush2.msra.mxu0 0.0
    %394 = vmatprep.subr.mxu0 0.0
    %395 = vmatpush2.msra.mxu0 0.0
    %396 = vmatprep.subr.mxu0 0.0
    %397 = vmatpush2.msra.mxu0 0.0
    %398 = vmatprep.subr.mxu0 0.0
    %399 = vmatpush2.msra.mxu0 0.0
    %400 = vmatprep.subr.mxu0 0.0
    %401 = vmatpush2.msra.mxu0 0.0
    %402 = vmatprep.subr.mxu0 0.0
    %403 = vmatpush2.msra.mxu0 0.0
    %404 = vmatprep.subr.mxu0 0.0
    %405 = vmatpush2.msra.mxu0 0.0
    %406 = vmatprep.subr.mxu0 0.0
    %407 = vmatpush2.msra.mxu0 0.0
    %408 = vmatprep.subr.mxu0 0.0
    %409 = vmatpush2.msra.mxu0 0.0
    %410 = vmatprep.mubr.f32.mxu0 0.0
    %411 = vmatmul.mubr.f32.gmra.mxu0 %v210
    %v412 = vpop.f32.mrf.mxu0
    %v413 = vadd.f32 0.0, %v412
    %v414 = vpop.f32.mrf.mxu0
    %v415 = vadd.f32 0.0, %v414
    %416 = vdwg.mxu0
    %v417 = vld [vmem:[#allocation7] sm:$0xff]
    %v418 = vld [vmem:[#allocation7 + $0x8] sm:$0xff]
    %v419 = vld [vmem:[#allocation7 + $0x10] sm:$0xff]
    %v420 = vld [vmem:[#allocation7 + $0x18] sm:$0xff]
    %v421 = vld [vmem:[#allocation7 + $0x20] sm:$0xff]
    %v422 = vld [vmem:[#allocation7 + $0x28] sm:$0xff]
    %v423 = vld [vmem:[#allocation7 + $0x30] sm:$0xff]
    %v424 = vld [vmem:[#allocation7 + $0x38] sm:$0xff]
    %v425 = vld [vmem:[#allocation7 + $0x40] sm:$0xff]
    %v426 = vld [vmem:[#allocation7 + $0x48] sm:$0xff]
    %v427 = vld [vmem:[#allocation7 + $0x50] sm:$0xff]
    %v428 = vld [vmem:[#allocation7 + $0x58] sm:$0xff]
    %v429 = vld [vmem:[#allocation7 + $0x60] sm:$0xff]
    %v430 = vld [vmem:[#allocation7 + $0x68] sm:$0xff]
    %v431 = vld [vmem:[#allocation7 + $0x70] sm:$0xff]
    %v432 = vld [vmem:[#allocation7 + $0x78] sm:$0xff]
    %v433 = vld [vmem:[#allocation7 + $0x80] sm:$0xff]
    %v434 = vld [vmem:[#allocation7 + $0x88] sm:$0xff]
    %v435 = vld [vmem:[#allocation7 + $0x90] sm:$0xff]
    %v436 = vld [vmem:[#allocation7 + $0x98] sm:$0xff]
    %v437 = vld [vmem:[#allocation7 + $0xa0] sm:$0xff]
    %v438 = vld [vmem:[#allocation7 + $0xa8] sm:$0xff]
    %v439 = vld [vmem:[#allocation7 + $0xb0] sm:$0xff]
    %v440 = vld [vmem:[#allocation7 + $0xb8] sm:$0xff]
    %v441 = vld [vmem:[#allocation7 + $0xc0] sm:$0xff]
    %v442 = vld [vmem:[#allocation7 + $0xc8] sm:$0xff]
    %v443 = vld [vmem:[#allocation7 + $0xd0] sm:$0xff]
    %v444 = vld [vmem:[#allocation7 + $0xd8] sm:$0xff]
    %v445 = vld [vmem:[#allocation7 + $0xe0] sm:$0xff]
    %v446 = vld [vmem:[#allocation7 + $0xe8] sm:$0xff]
    %v447 = vld [vmem:[#allocation7 + $0xf0] sm:$0xff]
    %v448 = vld [vmem:[#allocation7 + $0xf8] sm:$0xff]
    %v449 = vld [vmem:[#allocation7 + $0x100] sm:$0xff]
    %v450 = vld [vmem:[#allocation7 + $0x108] sm:$0xff]
    %v451 = vld [vmem:[#allocation7 + $0x110] sm:$0xff]
    %v452 = vld [vmem:[#allocation7 + $0x118] sm:$0xff]
    %v453 = vld [vmem:[#allocation7 + $0x120] sm:$0xff]
    %v454 = vld [vmem:[#allocation7 + $0x128] sm:$0xff]
    %v455 = vld [vmem:[#allocation7 + $0x130] sm:$0xff]
    %v456 = vld [vmem:[#allocation7 + $0x138] sm:$0xff]
    %v457 = vld [vmem:[#allocation7 + $0x140] sm:$0xff]
    %v458 = vld [vmem:[#allocation7 + $0x148] sm:$0xff]
    %v459 = vld [vmem:[#allocation7 + $0x150] sm:$0xff]
    %v460 = vld [vmem:[#allocation7 + $0x158] sm:$0xff]
    %v461 = vld [vmem:[#allocation7 + $0x160] sm:$0xff]
    %v462 = vld [vmem:[#allocation7 + $0x168] sm:$0xff]
    %v463 = vld [vmem:[#allocation7 + $0x170] sm:$0xff]
    %v464 = vld [vmem:[#allocation7 + $0x178] sm:$0xff]
    %v465 = vld [vmem:[#allocation7 + $0x180] sm:$0xff]
    %v466 = vld [vmem:[#allocation7 + $0x188] sm:$0xff]
    %v467 = vld [vmem:[#allocation7 + $0x190] sm:$0xff]
    %v468 = vld [vmem:[#allocation7 + $0x198] sm:$0xff]
    %v469 = vld [vmem:[#allocation7 + $0x1a0] sm:$0xff]
    %v470 = vld [vmem:[#allocation7 + $0x1a8] sm:$0xff]
    %v471 = vld [vmem:[#allocation7 + $0x1b0] sm:$0xff]
    %v472 = vld [vmem:[#allocation7 + $0x1b8] sm:$0xff]
    %v473 = vld [vmem:[#allocation7 + $0x1c0] sm:$0xff]
    %v474 = vld [vmem:[#allocation7 + $0x1c8] sm:$0xff]
    %v475 = vld [vmem:[#allocation7 + $0x1d0] sm:$0xff]
    %v476 = vld [vmem:[#allocation7 + $0x1d8] sm:$0xff]
    %v477 = vld [vmem:[#allocation7 + $0x1e0] sm:$0xff]
    %v478 = vld [vmem:[#allocation7 + $0x1e8] sm:$0xff]
    %v479 = vld [vmem:[#allocation7 + $0x1f0] sm:$0xff]
    %v480 = vld [vmem:[#allocation7 + $0x1f8] sm:$0xff]
    %481 = vmatprep.subr.mxu0 %v478
    %482 = vmatpush1.msra.mxu0 %v477
    %483 = vmatprep.subr.mxu0 %v474
    %484 = vmatpush1.msra.mxu0 %v473
    %485 = vmatprep.subr.mxu0 %v470
    %486 = vmatpush1.msra.mxu0 %v469
    %487 = vmatprep.subr.mxu0 %v466
    %488 = vmatpush1.msra.mxu0 %v465
    %489 = vmatprep.subr.mxu0 %v462
    %490 = vmatpush1.msra.mxu0 %v461
    %491 = vmatprep.subr.mxu0 %v458
    %492 = vmatpush1.msra.mxu0 %v457
    %493 = vmatprep.subr.mxu0 %v454
    %494 = vmatpush1.msra.mxu0 %v453
    %495 = vmatprep.subr.mxu0 %v450
    %496 = vmatpush1.msra.mxu0 %v449
    %497 = vmatprep.subr.mxu0 %v446
    %498 = vmatpush1.msra.mxu0 %v445
    %499 = vmatprep.subr.mxu0 %v442
    %500 = vmatpush1.msra.mxu0 %v441
    %501 = vmatprep.subr.mxu0 %v438
    %502 = vmatpush1.msra.mxu0 %v437
    %503 = vmatprep.subr.mxu0 %v434
    %504 = vmatpush1.msra.mxu0 %v433
    %505 = vmatprep.subr.mxu0 %v430
    %506 = vmatpush1.msra.mxu0 %v429
    %507 = vmatprep.subr.mxu0 %v426
    %508 = vmatpush1.msra.mxu0 %v425
    %509 = vmatprep.subr.mxu0 %v422
    %510 = vmatpush1.msra.mxu0 %v421
    %511 = vmatprep.subr.mxu0 %v418
    %512 = vmatpush1.msra.mxu0 %v417
    %513 = vmatprep.subr.mxu0 0.0
    %514 = vmatpush2.msra.mxu0 0.0
    %515 = vmatprep.subr.mxu0 0.0
    %516 = vmatpush2.msra.mxu0 0.0
    %517 = vmatprep.subr.mxu0 0.0
    %518 = vmatpush2.msra.mxu0 0.0
    %519 = vmatprep.subr.mxu0 0.0
    %520 = vmatpush2.msra.mxu0 0.0
    %521 = vmatprep.subr.mxu0 0.0
    %522 = vmatpush2.msra.mxu0 0.0
    %523 = vmatprep.subr.mxu0 0.0
    %524 = vmatpush2.msra.mxu0 0.0
    %525 = vmatprep.subr.mxu0 0.0
    %526 = vmatpush2.msra.mxu0 0.0
    %527 = vmatprep.subr.mxu0 0.0
    %528 = vmatpush2.msra.mxu0 0.0
    %529 = vmatprep.subr.mxu0 0.0
    %530 = vmatpush2.msra.mxu0 0.0
    %531 = vmatprep.subr.mxu0 0.0
    %532 = vmatpush2.msra.mxu0 0.0
    %533 = vmatprep.subr.mxu0 0.0
    %534 = vmatpush2.msra.mxu0 0.0
    %535 = vmatprep.subr.mxu0 0.0
    %536 = vmatpush2.msra.mxu0 0.0
    %537 = vmatprep.subr.mxu0 0.0
    %538 = vmatpush2.msra.mxu0 0.0
    %539 = vmatprep.subr.mxu0 0.0
    %540 = vmatpush2.msra.mxu0 0.0
    %541 = vmatprep.subr.mxu0 0.0
    %542 = vmatpush2.msra.mxu0 0.0
    %543 = vmatprep.subr.mxu0 0.0
    %544 = vmatpush2.msra.mxu0 0.0
    %545 = vmatprep.mubr.f32.mxu0 0.0
    %546 = vmatmul.mubr.f32.gmra.mxu0 %v210
    %v547 = vpop.f32.mrf.mxu0
    %v548 = vadd.f32 0.0, %v547
    %v549 = vpop.f32.mrf.mxu0
    %v550 = vadd.f32 0.0, %v549
    %551 = vdwg.mxu0
    %552 = vmatprep.subr.mxu0 %v480
    %553 = vmatpush1.msra.mxu0 %v479
    %554 = vmatprep.subr.mxu0 %v476
    %555 = vmatpush1.msra.mxu0 %v475
    %556 = vmatprep.subr.mxu0 %v472
    %557 = vmatpush1.msra.mxu0 %v471
    %558 = vmatprep.subr.mxu0 %v468
    %559 = vmatpush1.msra.mxu0 %v467
    %560 = vmatprep.subr.mxu0 %v464
    %561 = vmatpush1.msra.mxu0 %v463
    %562 = vmatprep.subr.mxu0 %v460
    %563 = vmatpush1.msra.mxu0 %v459
    %564 = vmatprep.subr.mxu0 %v456
    %565 = vmatpush1.msra.mxu0 %v455
    %566 = vmatprep.subr.mxu0 %v452
    %567 = vmatpush1.msra.mxu0 %v451
    %568 = vmatprep.subr.mxu0 %v448
    %569 = vmatpush1.msra.mxu0 %v447
    %570 = vmatprep.subr.mxu0 %v444
    %571 = vmatpush1.msra.mxu0 %v443
    %572 = vmatprep.subr.mxu0 %v440
    %573 = vmatpush1.msra.mxu0 %v439
    %574 = vmatprep.subr.mxu0 %v436
    %575 = vmatpush1.msra.mxu0 %v435
    %576 = vmatprep.subr.mxu0 %v432
    %577 = vmatpush1.msra.mxu0 %v431
    %578 = vmatprep.subr.mxu0 %v428
    %579 = vmatpush1.msra.mxu0 %v427
    %580 = vmatprep.subr.mxu0 %v424
    %581 = vmatpush1.msra.mxu0 %v423
    %582 = vmatprep.subr.mxu0 %v420
    %583 = vmatpush1.msra.mxu0 %v419
    %584 = vmatprep.subr.mxu0 0.0
    %585 = vmatpush2.msra.mxu0 0.0
    %586 = vmatprep.subr.mxu0 0.0
    %587 = vmatpush2.msra.mxu0 0.0
    %588 = vmatprep.subr.mxu0 0.0
    %589 = vmatpush2.msra.mxu0 0.0
    %590 = vmatprep.subr.mxu0 0.0
    %591 = vmatpush2.msra.mxu0 0.0
    %592 = vmatprep.subr.mxu0 0.0
    %593 = vmatpush2.msra.mxu0 0.0
    %594 = vmatprep.subr.mxu0 0.0
    %595 = vmatpush2.msra.mxu0 0.0
    %596 = vmatprep.subr.mxu0 0.0
    %597 = vmatpush2.msra.mxu0 0.0
    %598 = vmatprep.subr.mxu0 0.0
    %599 = vmatpush2.msra.mxu0 0.0
    %600 = vmatprep.subr.mxu0 0.0
    %601 = vmatpush2.msra.mxu0 0.0
    %602 = vmatprep.subr.mxu0 0.0
    %603 = vmatpush2.msra.mxu0 0.0
    %604 = vmatprep.subr.mxu0 0.0
    %605 = vmatpush2.msra.mxu0 0.0
    %606 = vmatprep.subr.mxu0 0.0
    %607 = vmatpush2.msra.mxu0 0.0
    %608 = vmatprep.subr.mxu0 0.0
    %609 = vmatpush2.msra.mxu0 0.0
    %610 = vmatprep.subr.mxu0 0.0
    %611 = vmatpush2.msra.mxu0 0.0
    %612 = vmatprep.subr.mxu0 0.0
    %613 = vmatpush2.msra.mxu0 0.0
    %614 = vmatprep.subr.mxu0 0.0
    %615 = vmatpush2.msra.mxu0 0.0
    %616 = vmatprep.mubr.f32.mxu0 0.0
    %617 = vmatmul.mubr.f32.gmra.mxu0 %v210
    %v618 = vpop.f32.mrf.mxu0
    %v619 = vadd.f32 0.0, %v618
    %v620 = vpop.f32.mrf.mxu0
    %v621 = vadd.f32 0.0, %v620
    %622 = vdwg.mxu0
    %v623 = vmax.f32 %v342, %v548
    %v624 = vmax.f32 %v344, %v550
    %v625 = vmax.f32 %v413, %v619
    %v626 = vmax.f32 %v415, %v621
    %v627 = vld [vmem:[%s3] sm:$0xf]
    %v629 = vlaneseq
    %v630 = vshrl.u32 %v629, 7
    %v631 = vsub.s32 0, %v630
    %v632 = vrot.slane %v627, %v631
    %v633 = vlaneseq
    %v634 = vshrl.u32 %v633, 7
    %v635 = vsub.s32 1, %v634
    %v636 = vrot.slane %v627, %v635
    %v637 = vlaneseq
    %v638 = vshrl.u32 %v637, 7
    %v639 = vsub.s32 2, %v638
    %v640 = vrot.slane %v627, %v639
    %v641 = vlaneseq
    %v642 = vshrl.u32 %v641, 7
    %v643 = vsub.s32 3, %v642
    %v644 = vrot.slane %v627, %v643
    %v649 = vadd.f32 %v623, %v632
    %v650 = vadd.f32 %v624, %v636
    %v651 = vadd.f32 %v625, %v640
    %v652 = vadd.f32 %v626, %v644
    %v653 = vmax.f32 %v649, 0.0
    %v654 = vmax.f32 %v650, 0.0
    %v655 = vmax.f32 %v651, 0.0
    %v656 = vmax.f32 %v652, 0.0
    %v657 = vld [vmem:[#allocation8] sm:$0xff]
    %v658 = vld [vmem:[#allocation8 + $0x8] sm:$0xff]
    %v659 = vld [vmem:[#allocation8 + $0x10] sm:$0xff]
    %v660 = vld [vmem:[#allocation8 + $0x18] sm:$0xff]
    %v661 = vld [vmem:[#allocation8 + $0x20] sm:$0xff]
    %v662 = vld [vmem:[#allocation8 + $0x28] sm:$0xff]
    %v663 = vld [vmem:[#allocation8 + $0x30] sm:$0xff]
    %v664 = vld [vmem:[#allocation8 + $0x38] sm:$0xff]
    %v665 = vld [vmem:[#allocation8 + $0x40] sm:$0xff]
    %v666 = vld [vmem:[#allocation8 + $0x48] sm:$0xff]
    %v667 = vld [vmem:[#allocation8 + $0x50] sm:$0xff]
    %v668 = vld [vmem:[#allocation8 + $0x58] sm:$0xff]
    %v669 = vld [vmem:[#allocation8 + $0x60] sm:$0xff]
    %v670 = vld [vmem:[#allocation8 + $0x68] sm:$0xff]
    %v671 = vld [vmem:[#allocation8 + $0x70] sm:$0xff]
    %v672 = vld [vmem:[#allocation8 + $0x78] sm:$0xff]
    %v673 = vld [vmem:[#allocation8 + $0x80] sm:$0xff]
    %v674 = vld [vmem:[#allocation8 + $0x88] sm:$0xff]
    %v675 = vld [vmem:[#allocation8 + $0x90] sm:$0xff]
    %v676 = vld [vmem:[#allocation8 + $0x98] sm:$0xff]
    %v677 = vld [vmem:[#allocation8 + $0xa0] sm:$0xff]
    %v678 = vld [vmem:[#allocation8 + $0xa8] sm:$0xff]
    %v679 = vld [vmem:[#allocation8 + $0xb0] sm:$0xff]
    %v680 = vld [vmem:[#allocation8 + $0xb8] sm:$0xff]
    %v681 = vld [vmem:[#allocation8 + $0xc0] sm:$0xff]
    %v682 = vld [vmem:[#allocation8 + $0xc8] sm:$0xff]
    %v683 = vld [vmem:[#allocation8 + $0xd0] sm:$0xff]
    %v684 = vld [vmem:[#allocation8 + $0xd8] sm:$0xff]
    %v685 = vld [vmem:[#allocation8 + $0xe0] sm:$0xff]
    %v686 = vld [vmem:[#allocation8 + $0xe8] sm:$0xff]
    %v687 = vld [vmem:[#allocation8 + $0xf0] sm:$0xff]
    %v688 = vld [vmem:[#allocation8 + $0xf8] sm:$0xff]
    %v689 = vld [vmem:[#allocation8 + $0x100] sm:$0xff]
    %v690 = vld [vmem:[#allocation8 + $0x108] sm:$0xff]
    %v691 = vld [vmem:[#allocation8 + $0x110] sm:$0xff]
    %v692 = vld [vmem:[#allocation8 + $0x118] sm:$0xff]
    %v693 = vld [vmem:[#allocation8 + $0x120] sm:$0xff]
    %v694 = vld [vmem:[#allocation8 + $0x128] sm:$0xff]
    %v695 = vld [vmem:[#allocation8 + $0x130] sm:$0xff]
    %v696 = vld [vmem:[#allocation8 + $0x138] sm:$0xff]
    %v697 = vld [vmem:[#allocation8 + $0x140] sm:$0xff]
    %v698 = vld [vmem:[#allocation8 + $0x148] sm:$0xff]
    %v699 = vld [vmem:[#allocation8 + $0x150] sm:$0xff]
    %v700 = vld [vmem:[#allocation8 + $0x158] sm:$0xff]
    %v701 = vld [vmem:[#allocation8 + $0x160] sm:$0xff]
    %v702 = vld [vmem:[#allocation8 + $0x168] sm:$0xff]
    %v703 = vld [vmem:[#allocation8 + $0x170] sm:$0xff]
    %v704 = vld [vmem:[#allocation8 + $0x178] sm:$0xff]
    %v705 = vld [vmem:[#allocation8 + $0x180] sm:$0xff]
    %v706 = vld [vmem:[#allocation8 + $0x188] sm:$0xff]
    %v707 = vld [vmem:[#allocation8 + $0x190] sm:$0xff]
    %v708 = vld [vmem:[#allocation8 + $0x198] sm:$0xff]
    %v709 = vld [vmem:[#allocation8 + $0x1a0] sm:$0xff]
    %v710 = vld [vmem:[#allocation8 + $0x1a8] sm:$0xff]
    %v711 = vld [vmem:[#allocation8 + $0x1b0] sm:$0xff]
    %v712 = vld [vmem:[#allocation8 + $0x1b8] sm:$0xff]
    %v713 = vld [vmem:[#allocation8 + $0x1c0] sm:$0xff]
    %v714 = vld [vmem:[#allocation8 + $0x1c8] sm:$0xff]
    %v715 = vld [vmem:[#allocation8 + $0x1d0] sm:$0xff]
    %v716 = vld [vmem:[#allocation8 + $0x1d8] sm:$0xff]
    %v717 = vld [vmem:[#allocation8 + $0x1e0] sm:$0xff]
    %v718 = vld [vmem:[#allocation8 + $0x1e8] sm:$0xff]
    %v719 = vld [vmem:[#allocation8 + $0x1f0] sm:$0xff]
    %v720 = vld [vmem:[#allocation8 + $0x1f8] sm:$0xff]
    %v721 = vld [vmem:[#allocation8 + $0x200] sm:$0xff]
    %v722 = vld [vmem:[#allocation8 + $0x208] sm:$0xff]
    %v723 = vld [vmem:[#allocation8 + $0x210] sm:$0xff]
    %v724 = vld [vmem:[#allocation8 + $0x218] sm:$0xff]
    %v725 = vld [vmem:[#allocation8 + $0x220] sm:$0xff]
    %v726 = vld [vmem:[#allocation8 + $0x228] sm:$0xff]
    %v727 = vld [vmem:[#allocation8 + $0x230] sm:$0xff]
    %v728 = vld [vmem:[#allocation8 + $0x238] sm:$0xff]
    %v729 = vld [vmem:[#allocation8 + $0x240] sm:$0xff]
    %v730 = vld [vmem:[#allocation8 + $0x248] sm:$0xff]
    %v731 = vld [vmem:[#allocation8 + $0x250] sm:$0xff]
    %v732 = vld [vmem:[#allocation8 + $0x258] sm:$0xff]
    %v733 = vld [vmem:[#allocation8 + $0x260] sm:$0xff]
    %v734 = vld [vmem:[#allocation8 + $0x268] sm:$0xff]
    %v735 = vld [vmem:[#allocation8 + $0x270] sm:$0xff]
    %v736 = vld [vmem:[#allocation8 + $0x278] sm:$0xff]
    %v737 = vld [vmem:[#allocation8 + $0x280] sm:$0xff]
    %v738 = vld [vmem:[#allocation8 + $0x288] sm:$0xff]
    %v739 = vld [vmem:[#allocation8 + $0x290] sm:$0xff]
    %v740 = vld [vmem:[#allocation8 + $0x298] sm:$0xff]
    %v741 = vld [vmem:[#allocation8 + $0x2a0] sm:$0xff]
    %v742 = vld [vmem:[#allocation8 + $0x2a8] sm:$0xff]
    %v743 = vld [vmem:[#allocation8 + $0x2b0] sm:$0xff]
    %v744 = vld [vmem:[#allocation8 + $0x2b8] sm:$0xff]
    %v745 = vld [vmem:[#allocation8 + $0x2c0] sm:$0xff]
    %v746 = vld [vmem:[#allocation8 + $0x2c8] sm:$0xff]
    %v747 = vld [vmem:[#allocation8 + $0x2d0] sm:$0xff]
    %v748 = vld [vmem:[#allocation8 + $0x2d8] sm:$0xff]
    %v749 = vld [vmem:[#allocation8 + $0x2e0] sm:$0xff]
    %v750 = vld [vmem:[#allocation8 + $0x2e8] sm:$0xff]
    %v751 = vld [vmem:[#allocation8 + $0x2f0] sm:$0xff]
    %v752 = vld [vmem:[#allocation8 + $0x2f8] sm:$0xff]
    %v753 = vld [vmem:[#allocation8 + $0x300] sm:$0xff]
    %v754 = vld [vmem:[#allocation8 + $0x308] sm:$0xff]
    %v755 = vld [vmem:[#allocation8 + $0x310] sm:$0xff]
    %v756 = vld [vmem:[#allocation8 + $0x318] sm:$0xff]
    %v757 = vld [vmem:[#allocation8 + $0x320] sm:$0xff]
    %v758 = vld [vmem:[#allocation8 + $0x328] sm:$0xff]
    %v759 = vld [vmem:[#allocation8 + $0x330] sm:$0xff]
    %v760 = vld [vmem:[#allocation8 + $0x338] sm:$0xff]
    %v761 = vld [vmem:[#allocation8 + $0x340] sm:$0xff]
    %v762 = vld [vmem:[#allocation8 + $0x348] sm:$0xff]
    %v763 = vld [vmem:[#allocation8 + $0x350] sm:$0xff]
    %v764 = vld [vmem:[#allocation8 + $0x358] sm:$0xff]
    %v765 = vld [vmem:[#allocation8 + $0x360] sm:$0xff]
    %v766 = vld [vmem:[#allocation8 + $0x368] sm:$0xff]
    %v767 = vld [vmem:[#allocation8 + $0x370] sm:$0xff]
    %v768 = vld [vmem:[#allocation8 + $0x378] sm:$0xff]
    %v769 = vld [vmem:[#allocation8 + $0x380] sm:$0xff]
    %v770 = vld [vmem:[#allocation8 + $0x388] sm:$0xff]
    %v771 = vld [vmem:[#allocation8 + $0x390] sm:$0xff]
    %v772 = vld [vmem:[#allocation8 + $0x398] sm:$0xff]
    %v773 = vld [vmem:[#allocation8 + $0x3a0] sm:$0xff]
    %v774 = vld [vmem:[#allocation8 + $0x3a8] sm:$0xff]
    %v775 = vld [vmem:[#allocation8 + $0x3b0] sm:$0xff]
    %v776 = vld [vmem:[#allocation8 + $0x3b8] sm:$0xff]
    %v777 = vld [vmem:[#allocation8 + $0x3c0] sm:$0xff]
    %v778 = vld [vmem:[#allocation8 + $0x3c8] sm:$0xff]
    %v779 = vld [vmem:[#allocation8 + $0x3d0] sm:$0xff]
    %v780 = vld [vmem:[#allocation8 + $0x3d8] sm:$0xff]
    %v781 = vld [vmem:[#allocation8 + $0x3e0] sm:$0xff]
    %v782 = vld [vmem:[#allocation8 + $0x3e8] sm:$0xff]
    %v783 = vld [vmem:[#allocation8 + $0x3f0] sm:$0xff]
    %v784 = vld [vmem:[#allocation8 + $0x3f8] sm:$0xff]
    %785 = vmatprep.subr.mxu0 %v688
    %786 = vmatpush1.msra.mxu0 %v687
    %787 = vmatprep.subr.mxu0 %v686
    %788 = vmatpush1.msra.mxu0 %v685
    %789 = vmatprep.subr.mxu0 %v684
    %790 = vmatpush1.msra.mxu0 %v683
    %791 = vmatprep.subr.mxu0 %v682
    %792 = vmatpush1.msra.mxu0 %v681
    %793 = vmatprep.subr.mxu0 %v680
    %794 = vmatpush1.msra.mxu0 %v679
    %795 = vmatprep.subr.mxu0 %v678
    %796 = vmatpush1.msra.mxu0 %v677
    %797 = vmatprep.subr.mxu0 %v676
    %798 = vmatpush1.msra.mxu0 %v675
    %799 = vmatprep.subr.mxu0 %v674
    %800 = vmatpush1.msra.mxu0 %v673
    %801 = vmatprep.subr.mxu0 %v672
    %802 = vmatpush1.msra.mxu0 %v671
    %803 = vmatprep.subr.mxu0 %v670
    %804 = vmatpush1.msra.mxu0 %v669
    %805 = vmatprep.subr.mxu0 %v668
    %806 = vmatpush1.msra.mxu0 %v667
    %807 = vmatprep.subr.mxu0 %v666
    %808 = vmatpush1.msra.mxu0 %v665
    %809 = vmatprep.subr.mxu0 %v664
    %810 = vmatpush1.msra.mxu0 %v663
    %811 = vmatprep.subr.mxu0 %v662
    %812 = vmatpush1.msra.mxu0 %v661
    %813 = vmatprep.subr.mxu0 %v660
    %814 = vmatpush1.msra.mxu0 %v659
    %815 = vmatprep.subr.mxu0 %v658
    %816 = vmatpush1.msra.mxu0 %v657
    %817 = vmatprep.subr.mxu0 %v720
    %818 = vmatpush2.msra.mxu0 %v719
    %819 = vmatprep.subr.mxu0 %v718
    %820 = vmatpush2.msra.mxu0 %v717
    %821 = vmatprep.subr.mxu0 %v716
    %822 = vmatpush2.msra.mxu0 %v715
    %823 = vmatprep.subr.mxu0 %v714
    %824 = vmatpush2.msra.mxu0 %v713
    %825 = vmatprep.subr.mxu0 %v712
    %826 = vmatpush2.msra.mxu0 %v711
    %827 = vmatprep.subr.mxu0 %v710
    %828 = vmatpush2.msra.mxu0 %v709
    %829 = vmatprep.subr.mxu0 %v708
    %830 = vmatpush2.msra.mxu0 %v707
    %831 = vmatprep.subr.mxu0 %v706
    %832 = vmatpush2.msra.mxu0 %v705
    %833 = vmatprep.subr.mxu0 %v704
    %834 = vmatpush2.msra.mxu0 %v703
    %835 = vmatprep.subr.mxu0 %v702
    %836 = vmatpush2.msra.mxu0 %v701
    %837 = vmatprep.subr.mxu0 %v700
    %838 = vmatpush2.msra.mxu0 %v699
    %839 = vmatprep.subr.mxu0 %v698
    %840 = vmatpush2.msra.mxu0 %v697
    %841 = vmatprep.subr.mxu0 %v696
    %842 = vmatpush2.msra.mxu0 %v695
    %843 = vmatprep.subr.mxu0 %v694
    %844 = vmatpush2.msra.mxu0 %v693
    %845 = vmatprep.subr.mxu0 %v692
    %846 = vmatpush2.msra.mxu0 %v691
    %847 = vmatprep.subr.mxu0 %v690
    %848 = vmatpush2.msra.mxu0 %v689
    %849 = vmatprep.mubr.f32.mxu0 %v654
    %850 = vmatmul.mubr.f32.gmra.mxu0 %v653
    %v851 = vpop.f32.mrf.mxu0
    %v852 = vadd.f32 0.0, %v851
    %v853 = vpop.f32.mrf.mxu0
    %v854 = vadd.f32 0.0, %v853
    %855 = vdwg.mxu0
    %856 = vmatprep.subr.mxu0 %v752
    %857 = vmatpush1.msra.mxu0 %v751
    %858 = vmatprep.subr.mxu0 %v750
    %859 = vmatpush1.msra.mxu0 %v749
    %860 = vmatprep.subr.mxu0 %v748
    %861 = vmatpush1.msra.mxu0 %v747
    %862 = vmatprep.subr.mxu0 %v746
    %863 = vmatpush1.msra.mxu0 %v745
    %864 = vmatprep.subr.mxu0 %v744
    %865 = vmatpush1.msra.mxu0 %v743
    %866 = vmatprep.subr.mxu0 %v742
    %867 = vmatpush1.msra.mxu0 %v741
    %868 = vmatprep.subr.mxu0 %v740
    %869 = vmatpush1.msra.mxu0 %v739
    %870 = vmatprep.subr.mxu0 %v738
    %871 = vmatpush1.msra.mxu0 %v737
    %872 = vmatprep.subr.mxu0 %v736
    %873 = vmatpush1.msra.mxu0 %v735
    %874 = vmatprep.subr.mxu0 %v734
    %875 = vmatpush1.msra.mxu0 %v733
    %876 = vmatprep.subr.mxu0 %v732
    %877 = vmatpush1.msra.mxu0 %v731
    %878 = vmatprep.subr.mxu0 %v730
    %879 = vmatpush1.msra.mxu0 %v729
    %880 = vmatprep.subr.mxu0 %v728
    %881 = vmatpush1.msra.mxu0 %v727
    %882 = vmatprep.subr.mxu0 %v726
    %883 = vmatpush1.msra.mxu0 %v725
    %884 = vmatprep.subr.mxu0 %v724
    %885 = vmatpush1.msra.mxu0 %v723
    %886 = vmatprep.subr.mxu0 %v722
    %887 = vmatpush1.msra.mxu0 %v721
    %888 = vmatprep.subr.mxu0 %v784
    %889 = vmatpush2.msra.mxu0 %v783
    %890 = vmatprep.subr.mxu0 %v782
    %891 = vmatpush2.msra.mxu0 %v781
    %892 = vmatprep.subr.mxu0 %v780
    %893 = vmatpush2.msra.mxu0 %v779
    %894 = vmatprep.subr.mxu0 %v778
    %895 = vmatpush2.msra.mxu0 %v777
    %896 = vmatprep.subr.mxu0 %v776
    %897 = vmatpush2.msra.mxu0 %v775
    %898 = vmatprep.subr.mxu0 %v774
    %899 = vmatpush2.msra.mxu0 %v773
    %900 = vmatprep.subr.mxu0 %v772
    %901 = vmatpush2.msra.mxu0 %v771
    %902 = vmatprep.subr.mxu0 %v770
    %903 = vmatpush2.msra.mxu0 %v769
    %904 = vmatprep.subr.mxu0 %v768
    %905 = vmatpush2.msra.mxu0 %v767
    %906 = vmatprep.subr.mxu0 %v766
    %907 = vmatpush2.msra.mxu0 %v765
    %908 = vmatprep.subr.mxu0 %v764
    %909 = vmatpush2.msra.mxu0 %v763
    %910 = vmatprep.subr.mxu0 %v762
    %911 = vmatpush2.msra.mxu0 %v761
    %912 = vmatprep.subr.mxu0 %v760
    %913 = vmatpush2.msra.mxu0 %v759
    %914 = vmatprep.subr.mxu0 %v758
    %915 = vmatpush2.msra.mxu0 %v757
    %916 = vmatprep.subr.mxu0 %v756
    %917 = vmatpush2.msra.mxu0 %v755
    %918 = vmatprep.subr.mxu0 %v754
    %919 = vmatpush2.msra.mxu0 %v753
    %920 = vmatprep.mubr.f32.mxu0 %v656
    %921 = vmatmul.mubr.f32.gmra.mxu0 %v655
    %v922 = vpop.f32.mrf.mxu0
    %v923 = vadd.f32 %v852, %v922
    %v924 = vpop.f32.mrf.mxu0
    %v925 = vadd.f32 %v854, %v924
    %926 = vdwg.mxu0
    %v927 = vld [vmem:[#allocation10] sm:$0xff]
    %v928 = vld [vmem:[#allocation10 + $0x8] sm:$0xff]
    %v929 = vld [vmem:[#allocation10 + $0x10] sm:$0xff]
    %v930 = vld [vmem:[#allocation10 + $0x18] sm:$0xff]
    %v931 = vld [vmem:[#allocation10 + $0x20] sm:$0xff]
    %v932 = vld [vmem:[#allocation10 + $0x28] sm:$0xff]
    %v933 = vld [vmem:[#allocation10 + $0x30] sm:$0xff]
    %v934 = vld [vmem:[#allocation10 + $0x38] sm:$0xff]
    %v935 = vld [vmem:[#allocation10 + $0x40] sm:$0xff]
    %v936 = vld [vmem:[#allocation10 + $0x48] sm:$0xff]
    %v937 = vld [vmem:[#allocation10 + $0x50] sm:$0xff]
    %v938 = vld [vmem:[#allocation10 + $0x58] sm:$0xff]
    %v939 = vld [vmem:[#allocation10 + $0x60] sm:$0xff]
    %v940 = vld [vmem:[#allocation10 + $0x68] sm:$0xff]
    %v941 = vld [vmem:[#allocation10 + $0x70] sm:$0xff]
    %v942 = vld [vmem:[#allocation10 + $0x78] sm:$0xff]
    %v943 = vld [vmem:[#allocation10 + $0x80] sm:$0xff]
    %v944 = vld [vmem:[#allocation10 + $0x88] sm:$0xff]
    %v945 = vld [vmem:[#allocation10 + $0x90] sm:$0xff]
    %v946 = vld [vmem:[#allocation10 + $0x98] sm:$0xff]
    %v947 = vld [vmem:[#allocation10 + $0xa0] sm:$0xff]
    %v948 = vld [vmem:[#allocation10 + $0xa8] sm:$0xff]
    %v949 = vld [vmem:[#allocation10 + $0xb0] sm:$0xff]
    %v950 = vld [vmem:[#allocation10 + $0xb8] sm:$0xff]
    %v951 = vld [vmem:[#allocation10 + $0xc0] sm:$0xff]
    %v952 = vld [vmem:[#allocation10 + $0xc8] sm:$0xff]
    %v953 = vld [vmem:[#allocation10 + $0xd0] sm:$0xff]
    %v954 = vld [vmem:[#allocation10 + $0xd8] sm:$0xff]
    %v955 = vld [vmem:[#allocation10 + $0xe0] sm:$0xff]
    %v956 = vld [vmem:[#allocation10 + $0xe8] sm:$0xff]
    %v957 = vld [vmem:[#allocation10 + $0xf0] sm:$0xff]
    %v958 = vld [vmem:[#allocation10 + $0xf8] sm:$0xff]
    %v959 = vld [vmem:[#allocation10 + $0x100] sm:$0xff]
    %v960 = vld [vmem:[#allocation10 + $0x108] sm:$0xff]
    %v961 = vld [vmem:[#allocation10 + $0x110] sm:$0xff]
    %v962 = vld [vmem:[#allocation10 + $0x118] sm:$0xff]
    %v963 = vld [vmem:[#allocation10 + $0x120] sm:$0xff]
    %v964 = vld [vmem:[#allocation10 + $0x128] sm:$0xff]
    %v965 = vld [vmem:[#allocation10 + $0x130] sm:$0xff]
    %v966 = vld [vmem:[#allocation10 + $0x138] sm:$0xff]
    %v967 = vld [vmem:[#allocation10 + $0x140] sm:$0xff]
    %v968 = vld [vmem:[#allocation10 + $0x148] sm:$0xff]
    %v969 = vld [vmem:[#allocation10 + $0x150] sm:$0xff]
    %v970 = vld [vmem:[#allocation10 + $0x158] sm:$0xff]
    %v971 = vld [vmem:[#allocation10 + $0x160] sm:$0xff]
    %v972 = vld [vmem:[#allocation10 + $0x168] sm:$0xff]
    %v973 = vld [vmem:[#allocation10 + $0x170] sm:$0xff]
    %v974 = vld [vmem:[#allocation10 + $0x178] sm:$0xff]
    %v975 = vld [vmem:[#allocation10 + $0x180] sm:$0xff]
    %v976 = vld [vmem:[#allocation10 + $0x188] sm:$0xff]
    %v977 = vld [vmem:[#allocation10 + $0x190] sm:$0xff]
    %v978 = vld [vmem:[#allocation10 + $0x198] sm:$0xff]
    %v979 = vld [vmem:[#allocation10 + $0x1a0] sm:$0xff]
    %v980 = vld [vmem:[#allocation10 + $0x1a8] sm:$0xff]
    %v981 = vld [vmem:[#allocation10 + $0x1b0] sm:$0xff]
    %v982 = vld [vmem:[#allocation10 + $0x1b8] sm:$0xff]
    %v983 = vld [vmem:[#allocation10 + $0x1c0] sm:$0xff]
    %v984 = vld [vmem:[#allocation10 + $0x1c8] sm:$0xff]
    %v985 = vld [vmem:[#allocation10 + $0x1d0] sm:$0xff]
    %v986 = vld [vmem:[#allocation10 + $0x1d8] sm:$0xff]
    %v987 = vld [vmem:[#allocation10 + $0x1e0] sm:$0xff]
    %v988 = vld [vmem:[#allocation10 + $0x1e8] sm:$0xff]
    %v989 = vld [vmem:[#allocation10 + $0x1f0] sm:$0xff]
    %v990 = vld [vmem:[#allocation10 + $0x1f8] sm:$0xff]
    %v991 = vld [vmem:[#allocation10 + $0x200] sm:$0xff]
    %v992 = vld [vmem:[#allocation10 + $0x208] sm:$0xff]
    %v993 = vld [vmem:[#allocation10 + $0x210] sm:$0xff]
    %v994 = vld [vmem:[#allocation10 + $0x218] sm:$0xff]
    %v995 = vld [vmem:[#allocation10 + $0x220] sm:$0xff]
    %v996 = vld [vmem:[#allocation10 + $0x228] sm:$0xff]
    %v997 = vld [vmem:[#allocation10 + $0x230] sm:$0xff]
    %v998 = vld [vmem:[#allocation10 + $0x238] sm:$0xff]
    %v999 = vld [vmem:[#allocation10 + $0x240] sm:$0xff]
    %v1000 = vld [vmem:[#allocation10 + $0x248] sm:$0xff]
    %v1001 = vld [vmem:[#allocation10 + $0x250] sm:$0xff]
    %v1002 = vld [vmem:[#allocation10 + $0x258] sm:$0xff]
    %v1003 = vld [vmem:[#allocation10 + $0x260] sm:$0xff]
    %v1004 = vld [vmem:[#allocation10 + $0x268] sm:$0xff]
    %v1005 = vld [vmem:[#allocation10 + $0x270] sm:$0xff]
    %v1006 = vld [vmem:[#allocation10 + $0x278] sm:$0xff]
    %v1007 = vld [vmem:[#allocation10 + $0x280] sm:$0xff]
    %v1008 = vld [vmem:[#allocation10 + $0x288] sm:$0xff]
    %v1009 = vld [vmem:[#allocation10 + $0x290] sm:$0xff]
    %v1010 = vld [vmem:[#allocation10 + $0x298] sm:$0xff]
    %v1011 = vld [vmem:[#allocation10 + $0x2a0] sm:$0xff]
    %v1012 = vld [vmem:[#allocation10 + $0x2a8] sm:$0xff]
    %v1013 = vld [vmem:[#allocation10 + $0x2b0] sm:$0xff]
    %v1014 = vld [vmem:[#allocation10 + $0x2b8] sm:$0xff]
    %v1015 = vld [vmem:[#allocation10 + $0x2c0] sm:$0xff]
    %v1016 = vld [vmem:[#allocation10 + $0x2c8] sm:$0xff]
    %v1017 = vld [vmem:[#allocation10 + $0x2d0] sm:$0xff]
    %v1018 = vld [vmem:[#allocation10 + $0x2d8] sm:$0xff]
    %v1019 = vld [vmem:[#allocation10 + $0x2e0] sm:$0xff]
    %v1020 = vld [vmem:[#allocation10 + $0x2e8] sm:$0xff]
    %v1021 = vld [vmem:[#allocation10 + $0x2f0] sm:$0xff]
    %v1022 = vld [vmem:[#allocation10 + $0x2f8] sm:$0xff]
    %v1023 = vld [vmem:[#allocation10 + $0x300] sm:$0xff]
    %v1024 = vld [vmem:[#allocation10 + $0x308] sm:$0xff]
    %v1025 = vld [vmem:[#allocation10 + $0x310] sm:$0xff]
    %v1026 = vld [vmem:[#allocation10 + $0x318] sm:$0xff]
    %v1027 = vld [vmem:[#allocation10 + $0x320] sm:$0xff]
    %v1028 = vld [vmem:[#allocation10 + $0x328] sm:$0xff]
    %v1029 = vld [vmem:[#allocation10 + $0x330] sm:$0xff]
    %v1030 = vld [vmem:[#allocation10 + $0x338] sm:$0xff]
    %v1031 = vld [vmem:[#allocation10 + $0x340] sm:$0xff]
    %v1032 = vld [vmem:[#allocation10 + $0x348] sm:$0xff]
    %v1033 = vld [vmem:[#allocation10 + $0x350] sm:$0xff]
    %v1034 = vld [vmem:[#allocation10 + $0x358] sm:$0xff]
    %v1035 = vld [vmem:[#allocation10 + $0x360] sm:$0xff]
    %v1036 = vld [vmem:[#allocation10 + $0x368] sm:$0xff]
    %v1037 = vld [vmem:[#allocation10 + $0x370] sm:$0xff]
    %v1038 = vld [vmem:[#allocation10 + $0x378] sm:$0xff]
    %v1039 = vld [vmem:[#allocation10 + $0x380] sm:$0xff]
    %v1040 = vld [vmem:[#allocation10 + $0x388] sm:$0xff]
    %v1041 = vld [vmem:[#allocation10 + $0x390] sm:$0xff]
    %v1042 = vld [vmem:[#allocation10 + $0x398] sm:$0xff]
    %v1043 = vld [vmem:[#allocation10 + $0x3a0] sm:$0xff]
    %v1044 = vld [vmem:[#allocation10 + $0x3a8] sm:$0xff]
    %v1045 = vld [vmem:[#allocation10 + $0x3b0] sm:$0xff]
    %v1046 = vld [vmem:[#allocation10 + $0x3b8] sm:$0xff]
    %v1047 = vld [vmem:[#allocation10 + $0x3c0] sm:$0xff]
    %v1048 = vld [vmem:[#allocation10 + $0x3c8] sm:$0xff]
    %v1049 = vld [vmem:[#allocation10 + $0x3d0] sm:$0xff]
    %v1050 = vld [vmem:[#allocation10 + $0x3d8] sm:$0xff]
    %v1051 = vld [vmem:[#allocation10 + $0x3e0] sm:$0xff]
    %v1052 = vld [vmem:[#allocation10 + $0x3e8] sm:$0xff]
    %v1053 = vld [vmem:[#allocation10 + $0x3f0] sm:$0xff]
    %v1054 = vld [vmem:[#allocation10 + $0x3f8] sm:$0xff]
    %1055 = vmatprep.subr.mxu0 %v958
    %1056 = vmatpush1.msra.mxu0 %v957
    %1057 = vmatprep.subr.mxu0 %v956
    %1058 = vmatpush1.msra.mxu0 %v955
    %1059 = vmatprep.subr.mxu0 %v954
    %1060 = vmatpush1.msra.mxu0 %v953
    %1061 = vmatprep.subr.mxu0 %v952
    %1062 = vmatpush1.msra.mxu0 %v951
    %1063 = vmatprep.subr.mxu0 %v950
    %1064 = vmatpush1.msra.mxu0 %v949
    %1065 = vmatprep.subr.mxu0 %v948
    %1066 = vmatpush1.msra.mxu0 %v947
    %1067 = vmatprep.subr.mxu0 %v946
    %1068 = vmatpush1.msra.mxu0 %v945
    %1069 = vmatprep.subr.mxu0 %v944
    %1070 = vmatpush1.msra.mxu0 %v943
    %1071 = vmatprep.subr.mxu0 %v942
    %1072 = vmatpush1.msra.mxu0 %v941
    %1073 = vmatprep.subr.mxu0 %v940
    %1074 = vmatpush1.msra.mxu0 %v939
    %1075 = vmatprep.subr.mxu0 %v938
    %1076 = vmatpush1.msra.mxu0 %v937
    %1077 = vmatprep.subr.mxu0 %v936
    %1078 = vmatpush1.msra.mxu0 %v935
    %1079 = vmatprep.subr.mxu0 %v934
    %1080 = vmatpush1.msra.mxu0 %v933
    %1081 = vmatprep.subr.mxu0 %v932
    %1082 = vmatpush1.msra.mxu0 %v931
    %1083 = vmatprep.subr.mxu0 %v930
    %1084 = vmatpush1.msra.mxu0 %v929
    %1085 = vmatprep.subr.mxu0 %v928
    %1086 = vmatpush1.msra.mxu0 %v927
    %1087 = vmatprep.subr.mxu0 %v990
    %1088 = vmatpush2.msra.mxu0 %v989
    %1089 = vmatprep.subr.mxu0 %v988
    %1090 = vmatpush2.msra.mxu0 %v987
    %1091 = vmatprep.subr.mxu0 %v986
    %1092 = vmatpush2.msra.mxu0 %v985
    %1093 = vmatprep.subr.mxu0 %v984
    %1094 = vmatpush2.msra.mxu0 %v983
    %1095 = vmatprep.subr.mxu0 %v982
    %1096 = vmatpush2.msra.mxu0 %v981
    %1097 = vmatprep.subr.mxu0 %v980
    %1098 = vmatpush2.msra.mxu0 %v979
    %1099 = vmatprep.subr.mxu0 %v978
    %1100 = vmatpush2.msra.mxu0 %v977
    %1101 = vmatprep.subr.mxu0 %v976
    %1102 = vmatpush2.msra.mxu0 %v975
    %1103 = vmatprep.subr.mxu0 %v974
    %1104 = vmatpush2.msra.mxu0 %v973
    %1105 = vmatprep.subr.mxu0 %v972
    %1106 = vmatpush2.msra.mxu0 %v971
    %1107 = vmatprep.subr.mxu0 %v970
    %1108 = vmatpush2.msra.mxu0 %v969
    %1109 = vmatprep.subr.mxu0 %v968
    %1110 = vmatpush2.msra.mxu0 %v967
    %1111 = vmatprep.subr.mxu0 %v966
    %1112 = vmatpush2.msra.mxu0 %v965
    %1113 = vmatprep.subr.mxu0 %v964
    %1114 = vmatpush2.msra.mxu0 %v963
    %1115 = vmatprep.subr.mxu0 %v962
    %1116 = vmatpush2.msra.mxu0 %v961
    %1117 = vmatprep.subr.mxu0 %v960
    %1118 = vmatpush2.msra.mxu0 %v959
    %1119 = vmatprep.mubr.f32.mxu0 %v654
    %1120 = vmatmul.mubr.f32.gmra.mxu0 %v653
    %v1121 = vpop.f32.mrf.mxu0
    %v1122 = vadd.f32 0.0, %v1121
    %v1123 = vpop.f32.mrf.mxu0
    %v1124 = vadd.f32 0.0, %v1123
    %1125 = vdwg.mxu0
    %1126 = vmatprep.subr.mxu0 %v1022
    %1127 = vmatpush1.msra.mxu0 %v1021
    %1128 = vmatprep.subr.mxu0 %v1020
    %1129 = vmatpush1.msra.mxu0 %v1019
    %1130 = vmatprep.subr.mxu0 %v1018
    %1131 = vmatpush1.msra.mxu0 %v1017
    %1132 = vmatprep.subr.mxu0 %v1016
    %1133 = vmatpush1.msra.mxu0 %v1015
    %1134 = vmatprep.subr.mxu0 %v1014
    %1135 = vmatpush1.msra.mxu0 %v1013
    %1136 = vmatprep.subr.mxu0 %v1012
    %1137 = vmatpush1.msra.mxu0 %v1011
    %1138 = vmatprep.subr.mxu0 %v1010
    %1139 = vmatpush1.msra.mxu0 %v1009
    %1140 = vmatprep.subr.mxu0 %v1008
    %1141 = vmatpush1.msra.mxu0 %v1007
    %1142 = vmatprep.subr.mxu0 %v1006
    %1143 = vmatpush1.msra.mxu0 %v1005
    %1144 = vmatprep.subr.mxu0 %v1004
    %1145 = vmatpush1.msra.mxu0 %v1003
    %1146 = vmatprep.subr.mxu0 %v1002
    %1147 = vmatpush1.msra.mxu0 %v1001
    %1148 = vmatprep.subr.mxu0 %v1000
    %1149 = vmatpush1.msra.mxu0 %v999
    %1150 = vmatprep.subr.mxu0 %v998
    %1151 = vmatpush1.msra.mxu0 %v997
    %1152 = vmatprep.subr.mxu0 %v996
    %1153 = vmatpush1.msra.mxu0 %v995
    %1154 = vmatprep.subr.mxu0 %v994
    %1155 = vmatpush1.msra.mxu0 %v993
    %1156 = vmatprep.subr.mxu0 %v992
    %1157 = vmatpush1.msra.mxu0 %v991
    %1158 = vmatprep.subr.mxu0 %v1054
    %1159 = vmatpush2.msra.mxu0 %v1053
    %1160 = vmatprep.subr.mxu0 %v1052
    %1161 = vmatpush2.msra.mxu0 %v1051
    %1162 = vmatprep.subr.mxu0 %v1050
    %1163 = vmatpush2.msra.mxu0 %v1049
    %1164 = vmatprep.subr.mxu0 %v1048
    %1165 = vmatpush2.msra.mxu0 %v1047
    %1166 = vmatprep.subr.mxu0 %v1046
    %1167 = vmatpush2.msra.mxu0 %v1045
    %1168 = vmatprep.subr.mxu0 %v1044
    %1169 = vmatpush2.msra.mxu0 %v1043
    %1170 = vmatprep.subr.mxu0 %v1042
    %1171 = vmatpush2.msra.mxu0 %v1041
    %1172 = vmatprep.subr.mxu0 %v1040
    %1173 = vmatpush2.msra.mxu0 %v1039
    %1174 = vmatprep.subr.mxu0 %v1038
    %1175 = vmatpush2.msra.mxu0 %v1037
    %1176 = vmatprep.subr.mxu0 %v1036
    %1177 = vmatpush2.msra.mxu0 %v1035
    %1178 = vmatprep.subr.mxu0 %v1034
    %1179 = vmatpush2.msra.mxu0 %v1033
    %1180 = vmatprep.subr.mxu0 %v1032
    %1181 = vmatpush2.msra.mxu0 %v1031
    %1182 = vmatprep.subr.mxu0 %v1030
    %1183 = vmatpush2.msra.mxu0 %v1029
    %1184 = vmatprep.subr.mxu0 %v1028
    %1185 = vmatpush2.msra.mxu0 %v1027
    %1186 = vmatprep.subr.mxu0 %v1026
    %1187 = vmatpush2.msra.mxu0 %v1025
    %1188 = vmatprep.subr.mxu0 %v1024
    %1189 = vmatpush2.msra.mxu0 %v1023
    %1190 = vmatprep.mubr.f32.mxu0 %v656
    %1191 = vmatmul.mubr.f32.gmra.mxu0 %v655
    %v1192 = vpop.f32.mrf.mxu0
    %v1193 = vadd.f32 %v1122, %v1192
    %v1194 = vpop.f32.mrf.mxu0
    %v1195 = vadd.f32 %v1124, %v1194
    %1196 = vdwg.mxu0
    %v1197 = vmax.f32 %v923, %v1193
    %v1198 = vmax.f32 %v925, %v1195
    %v1199 = vld [vmem:[%s6] sm:$0x3]
    %v1201 = vlaneseq
    %v1202 = vshrl.u32 %v1201, 7
    %v1203 = vsub.s32 0, %v1202
    %v1204 = vrot.slane %v1199, %v1203
    %v1205 = vlaneseq
    %v1206 = vshrl.u32 %v1205, 7
    %v1207 = vsub.s32 1, %v1206
    %v1208 = vrot.slane %v1199, %v1207
    %v1211 = vadd.f32 %v1197, %v1204
    %v1212 = vadd.f32 %v1198, %v1208
    %v1213 = vmax.f32 %v1211, 0.0
    %v1214 = vmax.f32 %v1212, 0.0
    %v1215 = vld [vmem:[#allocation11] sm:$0xff]
    %v1216 = vld [vmem:[#allocation11 + $0x8] sm:$0xff]
    %v1217 = vld [vmem:[#allocation11 + $0x10] sm:$0xff]
    %v1218 = vld [vmem:[#allocation11 + $0x18] sm:$0xff]
    %v1219 = vld [vmem:[#allocation11 + $0x20] sm:$0xff]
    %v1220 = vld [vmem:[#allocation11 + $0x28] sm:$0xff]
    %v1221 = vld [vmem:[#allocation11 + $0x30] sm:$0xff]
    %v1222 = vld [vmem:[#allocation11 + $0x38] sm:$0xff]
    %v1223 = vld [vmem:[#allocation11 + $0x40] sm:$0xff]
    %v1224 = vld [vmem:[#allocation11 + $0x48] sm:$0xff]
    %v1225 = vld [vmem:[#allocation11 + $0x50] sm:$0xff]
    %v1226 = vld [vmem:[#allocation11 + $0x58] sm:$0xff]
    %v1227 = vld [vmem:[#allocation11 + $0x60] sm:$0xff]
    %v1228 = vld [vmem:[#allocation11 + $0x68] sm:$0xff]
    %v1229 = vld [vmem:[#allocation11 + $0x70] sm:$0xff]
    %v1230 = vld [vmem:[#allocation11 + $0x78] sm:$0xff]
    %v1231 = vld [vmem:[#allocation11 + $0x80] sm:$0xff]
    %v1232 = vld [vmem:[#allocation11 + $0x88] sm:$0xff]
    %v1233 = vld [vmem:[#allocation11 + $0x90] sm:$0xff]
    %v1234 = vld [vmem:[#allocation11 + $0x98] sm:$0xff]
    %v1235 = vld [vmem:[#allocation11 + $0xa0] sm:$0xff]
    %v1236 = vld [vmem:[#allocation11 + $0xa8] sm:$0xff]
    %v1237 = vld [vmem:[#allocation11 + $0xb0] sm:$0xff]
    %v1238 = vld [vmem:[#allocation11 + $0xb8] sm:$0xff]
    %v1239 = vld [vmem:[#allocation11 + $0xc0] sm:$0xff]
    %v1240 = vld [vmem:[#allocation11 + $0xc8] sm:$0xff]
    %v1241 = vld [vmem:[#allocation11 + $0xd0] sm:$0xff]
    %v1242 = vld [vmem:[#allocation11 + $0xd8] sm:$0xff]
    %v1243 = vld [vmem:[#allocation11 + $0xe0] sm:$0xff]
    %v1244 = vld [vmem:[#allocation11 + $0xe8] sm:$0xff]
    %v1245 = vld [vmem:[#allocation11 + $0xf0] sm:$0xff]
    %v1246 = vld [vmem:[#allocation11 + $0xf8] sm:$0xff]
    %v1247 = vld [vmem:[%s8] sm:$0x1]
    %v1249 = vlaneseq
    %v1250 = vshrl.u32 %v1249, 7
    %v1251 = vsub.s32 0, %v1250
    %v1252 = vrot.slane %v1247, %v1251
    %1254 = vmatprep.subr.mxu0 0.0
    %1255 = vmatpush1.msra.mxu0 %v1230
    %1256 = vmatprep.subr.mxu0 0.0
    %1257 = vmatpush1.msra.mxu0 %v1229
    %1258 = vmatprep.subr.mxu0 0.0
    %1259 = vmatpush1.msra.mxu0 %v1228
    %1260 = vmatprep.subr.mxu0 0.0
    %1261 = vmatpush1.msra.mxu0 %v1227
    %1262 = vmatprep.subr.mxu0 0.0
    %1263 = vmatpush1.msra.mxu0 %v1226
    %1264 = vmatprep.subr.mxu0 0.0
    %1265 = vmatpush1.msra.mxu0 %v1225
    %1266 = vmatprep.subr.mxu0 0.0
    %1267 = vmatpush1.msra.mxu0 %v1224
    %1268 = vmatprep.subr.mxu0 0.0
    %1269 = vmatpush1.msra.mxu0 %v1223
    %1270 = vmatprep.subr.mxu0 0.0
    %1271 = vmatpush1.msra.mxu0 %v1222
    %1272 = vmatprep.subr.mxu0 0.0
    %1273 = vmatpush1.msra.mxu0 %v1221
    %1274 = vmatprep.subr.mxu0 0.0
    %1275 = vmatpush1.msra.mxu0 %v1220
    %1276 = vmatprep.subr.mxu0 0.0
    %1277 = vmatpush1.msra.mxu0 %v1219
    %1278 = vmatprep.subr.mxu0 0.0
    %1279 = vmatpush1.msra.mxu0 %v1218
    %1280 = vmatprep.subr.mxu0 0.0
    %1281 = vmatpush1.msra.mxu0 %v1217
    %1282 = vmatprep.subr.mxu0 0.0
    %1283 = vmatpush1.msra.mxu0 %v1216
    %1284 = vmatprep.subr.mxu0 0.0
    %1285 = vmatpush1.msra.mxu0 %v1215
    %1286 = vmatprep.subr.mxu0 0.0
    %1287 = vmatpush2.msra.mxu0 %v1246
    %1288 = vmatprep.subr.mxu0 0.0
    %1289 = vmatpush2.msra.mxu0 %v1245
    %1290 = vmatprep.subr.mxu0 0.0
    %1291 = vmatpush2.msra.mxu0 %v1244
    %1292 = vmatprep.subr.mxu0 0.0
    %1293 = vmatpush2.msra.mxu0 %v1243
    %1294 = vmatprep.subr.mxu0 0.0
    %1295 = vmatpush2.msra.mxu0 %v1242
    %1296 = vmatprep.subr.mxu0 0.0
    %1297 = vmatpush2.msra.mxu0 %v1241
    %1298 = vmatprep.subr.mxu0 0.0
    %1299 = vmatpush2.msra.mxu0 %v1240
    %1300 = vmatprep.subr.mxu0 0.0
    %1301 = vmatpush2.msra.mxu0 %v1239
    %1302 = vmatprep.subr.mxu0 0.0
    %1303 = vmatpush2.msra.mxu0 %v1238
    %1304 = vmatprep.subr.mxu0 0.0
    %1305 = vmatpush2.msra.mxu0 %v1237
    %1306 = vmatprep.subr.mxu0 0.0
    %1307 = vmatpush2.msra.mxu0 %v1236
    %1308 = vmatprep.subr.mxu0 0.0
    %1309 = vmatpush2.msra.mxu0 %v1235
    %1310 = vmatprep.subr.mxu0 0.0
    %1311 = vmatpush2.msra.mxu0 %v1234
    %1312 = vmatprep.subr.mxu0 0.0
    %1313 = vmatpush2.msra.mxu0 %v1233
    %1314 = vmatprep.subr.mxu0 0.0
    %1315 = vmatpush2.msra.mxu0 %v1232
    %1316 = vmatprep.subr.mxu0 0.0
    %1317 = vmatpush2.msra.mxu0 %v1231
    %1318 = vmatprep.mubr.f32.mxu0 %v1214
    %1319 = vmatmul.mubr.f32.gmra.mxu0 %v1213
    %v1320 = vpop.f32.mrf.mxu0
    %v1321 = vadd.f32 %v1252, %v1320
    %v1322 = vpop.f32.mrf.mxu0
    %1323 = vdwg.mxu0
    %v1324 = vmax.f32 %v1321, 0.0
    %v1325 = vld [vmem:[#allocation13] sm:$0xff]
    %v1326 = vld [vmem:[#allocation13 + $0x8] sm:$0xff]
    %v1327 = vld [vmem:[#allocation13 + $0x10] sm:$0xff]
    %v1328 = vld [vmem:[#allocation13 + $0x18] sm:$0xff]
    %v1329 = vld [vmem:[#allocation13 + $0x20] sm:$0xff]
    %v1330 = vld [vmem:[#allocation13 + $0x28] sm:$0xff]
    %v1331 = vld [vmem:[#allocation13 + $0x30] sm:$0xff]
    %v1332 = vld [vmem:[#allocation13 + $0x38] sm:$0xff]
    %v1333 = vld [vmem:[#allocation13 + $0x40] sm:$0xff]
    %v1334 = vld [vmem:[#allocation13 + $0x48] sm:$0xff]
    %v1335 = vld [vmem:[#allocation13 + $0x50] sm:$0xff]
    %v1336 = vld [vmem:[#allocation13 + $0x58] sm:$0xff]
    %v1337 = vld [vmem:[#allocation13 + $0x60] sm:$0xff]
    %v1338 = vld [vmem:[#allocation13 + $0x68] sm:$0xff]
    %v1339 = vld [vmem:[#allocation13 + $0x70] sm:$0xff]
    %v1340 = vld [vmem:[#allocation13 + $0x78] sm:$0xff]
    %v1341 = vld [vmem:[%s10] sm:$0x1]
    %v1343 = vlaneseq
    %v1344 = vshrl.u32 %v1343, 7
    %v1345 = vsub.s32 0, %v1344
    %v1346 = vrot.slane %v1341, %v1345
    %1348 = vmatprep.subr.mxu0 0.0
    %1349 = vmatpush1.msra.mxu0 %v1340
    %1350 = vmatprep.subr.mxu0 0.0
    %1351 = vmatpush1.msra.mxu0 %v1339
    %1352 = vmatprep.subr.mxu0 0.0
    %1353 = vmatpush1.msra.mxu0 %v1338
    %1354 = vmatprep.subr.mxu0 0.0
    %1355 = vmatpush1.msra.mxu0 %v1337
    %1356 = vmatprep.subr.mxu0 0.0
    %1357 = vmatpush1.msra.mxu0 %v1336
    %1358 = vmatprep.subr.mxu0 0.0
    %1359 = vmatpush1.msra.mxu0 %v1335
    %1360 = vmatprep.subr.mxu0 0.0
    %1361 = vmatpush1.msra.mxu0 %v1334
    %1362 = vmatprep.subr.mxu0 0.0
    %1363 = vmatpush1.msra.mxu0 %v1333
    %1364 = vmatprep.subr.mxu0 0.0
    %1365 = vmatpush1.msra.mxu0 %v1332
    %1366 = vmatprep.subr.mxu0 0.0
    %1367 = vmatpush1.msra.mxu0 %v1331
    %1368 = vmatprep.subr.mxu0 0.0
    %1369 = vmatpush1.msra.mxu0 %v1330
    %1370 = vmatprep.subr.mxu0 0.0
    %1371 = vmatpush1.msra.mxu0 %v1329
    %1372 = vmatprep.subr.mxu0 0.0
    %1373 = vmatpush1.msra.mxu0 %v1328
    %1374 = vmatprep.subr.mxu0 0.0
    %1375 = vmatpush1.msra.mxu0 %v1327
    %1376 = vmatprep.subr.mxu0 0.0
    %1377 = vmatpush1.msra.mxu0 %v1326
    %1378 = vmatprep.subr.mxu0 0.0
    %1379 = vmatpush1.msra.mxu0 %v1325
    %1380 = vmatprep.subr.mxu0 0.0
    %1381 = vmatpush2.msra.mxu0 0.0
    %1382 = vmatprep.subr.mxu0 0.0
    %1383 = vmatpush2.msra.mxu0 0.0
    %1384 = vmatprep.subr.mxu0 0.0
    %1385 = vmatpush2.msra.mxu0 0.0
    %1386 = vmatprep.subr.mxu0 0.0
    %1387 = vmatpush2.msra.mxu0 0.0
    %1388 = vmatprep.subr.mxu0 0.0
    %1389 = vmatpush2.msra.mxu0 0.0
    %1390 = vmatprep.subr.mxu0 0.0
    %1391 = vmatpush2.msra.mxu0 0.0
    %1392 = vmatprep.subr.mxu0 0.0
    %1393 = vmatpush2.msra.mxu0 0.0
    %1394 = vmatprep.subr.mxu0 0.0
    %1395 = vmatpush2.msra.mxu0 0.0
    %1396 = vmatprep.subr.mxu0 0.0
    %1397 = vmatpush2.msra.mxu0 0.0
    %1398 = vmatprep.subr.mxu0 0.0
    %1399 = vmatpush2.msra.mxu0 0.0
    %1400 = vmatprep.subr.mxu0 0.0
    %1401 = vmatpush2.msra.mxu0 0.0
    %1402 = vmatprep.subr.mxu0 0.0
    %1403 = vmatpush2.msra.mxu0 0.0
    %1404 = vmatprep.subr.mxu0 0.0
    %1405 = vmatpush2.msra.mxu0 0.0
    %1406 = vmatprep.subr.mxu0 0.0
    %1407 = vmatpush2.msra.mxu0 0.0
    %1408 = vmatprep.subr.mxu0 0.0
    %1409 = vmatpush2.msra.mxu0 0.0
    %1410 = vmatprep.subr.mxu0 0.0
    %1411 = vmatpush2.msra.mxu0 0.0
    %1412 = vmatprep.mubr.f32.mxu0 0.0
    %1413 = vmatmul.mubr.f32.gmra.mxu0 %v1324
    %v1414 = vpop.f32.mrf.mxu0
    %v1415 = vadd.f32 %v1346, %v1414
    %v1416 = vpop.f32.mrf.mxu0
    %1417 = vdwg.mxu0
    %v1418 = vld [vmem:[#allocation14] sm:$0xff]
    %v1419 = vld [vmem:[#allocation14 + $0x8] sm:$0xff]
    %v1420 = vld [vmem:[#allocation14 + $0x10] sm:$0xff]
    %v1421 = vld [vmem:[#allocation14 + $0x18] sm:$0xff]
    %v1422 = vld [vmem:[#allocation14 + $0x20] sm:$0xff]
    %v1423 = vld [vmem:[#allocation14 + $0x28] sm:$0xff]
    %v1424 = vld [vmem:[#allocation14 + $0x30] sm:$0xff]
    %v1425 = vld [vmem:[#allocation14 + $0x38] sm:$0xff]
    %v1426 = vld [vmem:[#allocation14 + $0x40] sm:$0xff]
    %v1427 = vld [vmem:[#allocation14 + $0x48] sm:$0xff]
    %v1428 = vld [vmem:[#allocation14 + $0x50] sm:$0xff]
    %v1429 = vld [vmem:[#allocation14 + $0x58] sm:$0xff]
    %v1430 = vld [vmem:[#allocation14 + $0x60] sm:$0xff]
    %v1431 = vld [vmem:[#allocation14 + $0x68] sm:$0xff]
    %v1432 = vld [vmem:[#allocation14 + $0x70] sm:$0xff]
    %v1433 = vld [vmem:[#allocation14 + $0x78] sm:$0xff]
    %v1434 = vld [vmem:[%s12] sm:$0x1]
    %v1436 = vlaneseq
    %v1437 = vshrl.u32 %v1436, 7
    %v1438 = vsub.s32 0, %v1437
    %v1439 = vrot.slane %v1434, %v1438
    %1441 = vmatprep.subr.mxu0 0.0
    %1442 = vmatpush1.msra.mxu0 %v1433
    %1443 = vmatprep.subr.mxu0 0.0
    %1444 = vmatpush1.msra.mxu0 %v1432
    %1445 = vmatprep.subr.mxu0 0.0
    %1446 = vmatpush1.msra.mxu0 %v1431
    %1447 = vmatprep.subr.mxu0 0.0
    %1448 = vmatpush1.msra.mxu0 %v1430
    %1449 = vmatprep.subr.mxu0 0.0
    %1450 = vmatpush1.msra.mxu0 %v1429
    %1451 = vmatprep.subr.mxu0 0.0
    %1452 = vmatpush1.msra.mxu0 %v1428
    %1453 = vmatprep.subr.mxu0 0.0
    %1454 = vmatpush1.msra.mxu0 %v1427
    %1455 = vmatprep.subr.mxu0 0.0
    %1456 = vmatpush1.msra.mxu0 %v1426
    %1457 = vmatprep.subr.mxu0 0.0
    %1458 = vmatpush1.msra.mxu0 %v1425
    %1459 = vmatprep.subr.mxu0 0.0
    %1460 = vmatpush1.msra.mxu0 %v1424
    %1461 = vmatprep.subr.mxu0 0.0
    %1462 = vmatpush1.msra.mxu0 %v1423
    %1463 = vmatprep.subr.mxu0 0.0
    %1464 = vmatpush1.msra.mxu0 %v1422
    %1465 = vmatprep.subr.mxu0 0.0
    %1466 = vmatpush1.msra.mxu0 %v1421
    %1467 = vmatprep.subr.mxu0 0.0
    %1468 = vmatpush1.msra.mxu0 %v1420
    %1469 = vmatprep.subr.mxu0 0.0
    %1470 = vmatpush1.msra.mxu0 %v1419
    %1471 = vmatprep.subr.mxu0 0.0
    %1472 = vmatpush1.msra.mxu0 %v1418
    %1473 = vmatprep.subr.mxu0 0.0
    %1474 = vmatpush2.msra.mxu0 0.0
    %1475 = vmatprep.subr.mxu0 0.0
    %1476 = vmatpush2.msra.mxu0 0.0
    %1477 = vmatprep.subr.mxu0 0.0
    %1478 = vmatpush2.msra.mxu0 0.0
    %1479 = vmatprep.subr.mxu0 0.0
    %1480 = vmatpush2.msra.mxu0 0.0
    %1481 = vmatprep.subr.mxu0 0.0
    %1482 = vmatpush2.msra.mxu0 0.0
    %1483 = vmatprep.subr.mxu0 0.0
    %1484 = vmatpush2.msra.mxu0 0.0
    %1485 = vmatprep.subr.mxu0 0.0
    %1486 = vmatpush2.msra.mxu0 0.0
    %1487 = vmatprep.subr.mxu0 0.0
    %1488 = vmatpush2.msra.mxu0 0.0
    %1489 = vmatprep.subr.mxu0 0.0
    %1490 = vmatpush2.msra.mxu0 0.0
    %1491 = vmatprep.subr.mxu0 0.0
    %1492 = vmatpush2.msra.mxu0 0.0
    %1493 = vmatprep.subr.mxu0 0.0
    %1494 = vmatpush2.msra.mxu0 0.0
    %1495 = vmatprep.subr.mxu0 0.0
    %1496 = vmatpush2.msra.mxu0 0.0
    %1497 = vmatprep.subr.mxu0 0.0
    %1498 = vmatpush2.msra.mxu0 0.0
    %1499 = vmatprep.subr.mxu0 0.0
    %1500 = vmatpush2.msra.mxu0 0.0
    %1501 = vmatprep.subr.mxu0 0.0
    %1502 = vmatpush2.msra.mxu0 0.0
    %1503 = vmatprep.subr.mxu0 0.0
    %1504 = vmatpush2.msra.mxu0 0.0
    %1505 = vmatprep.mubr.f32.mxu0 0.0
    %1506 = vmatmul.mubr.f32.gmra.mxu0 %v1415
    %v1507 = vpop.f32.mrf.mxu0
    %v1508 = vadd.f32 %v1439, %v1507
    %v1509 = vpop.f32.mrf.mxu0
    %1510 = vdwg.mxu0
    %v1511 = vmax.f32 %v1508, 0.0
    %v1512 = vld [vmem:[#allocation16] sm:$0xff]
    %v1513 = vld [vmem:[#allocation16 + $0x8] sm:$0xff]
    %v1514 = vld [vmem:[#allocation16 + $0x10] sm:$0xff]
    %v1515 = vld [vmem:[#allocation16 + $0x18] sm:$0xff]
    %v1516 = vld [vmem:[#allocation16 + $0x20] sm:$0xff]
    %v1517 = vld [vmem:[#allocation16 + $0x28] sm:$0xff]
    %v1518 = vld [vmem:[#allocation16 + $0x30] sm:$0xff]
    %v1519 = vld [vmem:[#allocation16 + $0x38] sm:$0xff]
    %v1520 = vld [vmem:[#allocation16 + $0x40] sm:$0xff]
    %v1521 = vld [vmem:[#allocation16 + $0x48] sm:$0xff]
    %v1522 = vld [vmem:[#allocation16 + $0x50] sm:$0xff]
    %v1523 = vld [vmem:[#allocation16 + $0x58] sm:$0xff]
    %v1524 = vld [vmem:[#allocation16 + $0x60] sm:$0xff]
    %v1525 = vld [vmem:[#allocation16 + $0x68] sm:$0xff]
    %v1526 = vld [vmem:[#allocation16 + $0x70] sm:$0xff]
    %v1527 = vld [vmem:[#allocation16 + $0x78] sm:$0xff]
    %v1528 = vld [vmem:[#allocation16 + $0x80] sm:$0xff]
    %v1529 = vld [vmem:[#allocation16 + $0x88] sm:$0xff]
    %v1530 = vld [vmem:[#allocation16 + $0x90] sm:$0xff]
    %v1531 = vld [vmem:[#allocation16 + $0x98] sm:$0xff]
    %v1532 = vld [vmem:[#allocation16 + $0xa0] sm:$0xff]
    %v1533 = vld [vmem:[#allocation16 + $0xa8] sm:$0xff]
    %v1534 = vld [vmem:[#allocation16 + $0xb0] sm:$0xff]
    %v1535 = vld [vmem:[#allocation16 + $0xb8] sm:$0xff]
    %v1536 = vld [vmem:[#allocation16 + $0xc0] sm:$0xff]
    %v1537 = vld [vmem:[#allocation16 + $0xc8] sm:$0xff]
    %v1538 = vld [vmem:[#allocation16 + $0xd0] sm:$0xff]
    %v1539 = vld [vmem:[#allocation16 + $0xd8] sm:$0xff]
    %v1540 = vld [vmem:[#allocation16 + $0xe0] sm:$0xff]
    %v1541 = vld [vmem:[#allocation16 + $0xe8] sm:$0xff]
    %v1542 = vld [vmem:[#allocation16 + $0xf0] sm:$0xff]
    %v1543 = vld [vmem:[#allocation16 + $0xf8] sm:$0xff]
    %v1544 = vld [vmem:[%s14] sm:$0x3]
    %v1546 = vlaneseq
    %v1547 = vshrl.u32 %v1546, 7
    %v1548 = vsub.s32 0, %v1547
    %v1549 = vrot.slane %v1544, %v1548
    %v1550 = vlaneseq
    %v1551 = vshrl.u32 %v1550, 7
    %v1552 = vsub.s32 1, %v1551
    %v1553 = vrot.slane %v1544, %v1552
    %1556 = vmatprep.subr.mxu0 %v1543
    %1557 = vmatpush1.msra.mxu0 %v1542
    %1558 = vmatprep.subr.mxu0 %v1541
    %1559 = vmatpush1.msra.mxu0 %v1540
    %1560 = vmatprep.subr.mxu0 %v1539
    %1561 = vmatpush1.msra.mxu0 %v1538
    %1562 = vmatprep.subr.mxu0 %v1537
    %1563 = vmatpush1.msra.mxu0 %v1536
    %1564 = vmatprep.subr.mxu0 %v1535
    %1565 = vmatpush1.msra.mxu0 %v1534
    %1566 = vmatprep.subr.mxu0 %v1533
    %1567 = vmatpush1.msra.mxu0 %v1532
    %1568 = vmatprep.subr.mxu0 %v1531
    %1569 = vmatpush1.msra.mxu0 %v1530
    %1570 = vmatprep.subr.mxu0 %v1529
    %1571 = vmatpush1.msra.mxu0 %v1528
    %1572 = vmatprep.subr.mxu0 %v1527
    %1573 = vmatpush1.msra.mxu0 %v1526
    %1574 = vmatprep.subr.mxu0 %v1525
    %1575 = vmatpush1.msra.mxu0 %v1524
    %1576 = vmatprep.subr.mxu0 %v1523
    %1577 = vmatpush1.msra.mxu0 %v1522
    %1578 = vmatprep.subr.mxu0 %v1521
    %1579 = vmatpush1.msra.mxu0 %v1520
    %1580 = vmatprep.subr.mxu0 %v1519
    %1581 = vmatpush1.msra.mxu0 %v1518
    %1582 = vmatprep.subr.mxu0 %v1517
    %1583 = vmatpush1.msra.mxu0 %v1516
    %1584 = vmatprep.subr.mxu0 %v1515
    %1585 = vmatpush1.msra.mxu0 %v1514
    %1586 = vmatprep.subr.mxu0 %v1513
    %1587 = vmatpush1.msra.mxu0 %v1512
    %1588 = vmatprep.subr.mxu0 0.0
    %1589 = vmatpush2.msra.mxu0 0.0
    %1590 = vmatprep.subr.mxu0 0.0
    %1591 = vmatpush2.msra.mxu0 0.0
    %1592 = vmatprep.subr.mxu0 0.0
    %1593 = vmatpush2.msra.mxu0 0.0
    %1594 = vmatprep.subr.mxu0 0.0
    %1595 = vmatpush2.msra.mxu0 0.0
    %1596 = vmatprep.subr.mxu0 0.0
    %1597 = vmatpush2.msra.mxu0 0.0
    %1598 = vmatprep.subr.mxu0 0.0
    %1599 = vmatpush2.msra.mxu0 0.0
    %1600 = vmatprep.subr.mxu0 0.0
    %1601 = vmatpush2.msra.mxu0 0.0
    %1602 = vmatprep.subr.mxu0 0.0
    %1603 = vmatpush2.msra.mxu0 0.0
    %1604 = vmatprep.subr.mxu0 0.0
    %1605 = vmatpush2.msra.mxu0 0.0
    %1606 = vmatprep.subr.mxu0 0.0
    %1607 = vmatpush2.msra.mxu0 0.0
    %1608 = vmatprep.subr.mxu0 0.0
    %1609 = vmatpush2.msra.mxu0 0.0
    %1610 = vmatprep.subr.mxu0 0.0
    %1611 = vmatpush2.msra.mxu0 0.0
    %1612 = vmatprep.subr.mxu0 0.0
    %1613 = vmatpush2.msra.mxu0 0.0
    %1614 = vmatprep.subr.mxu0 0.0
    %1615 = vmatpush2.msra.mxu0 0.0
    %1616 = vmatprep.subr.mxu0 0.0
    %1617 = vmatpush2.msra.mxu0 0.0
    %1618 = vmatprep.subr.mxu0 0.0
    %1619 = vmatpush2.msra.mxu0 0.0
    %1620 = vmatprep.mubr.f32.mxu0 0.0
    %1621 = vmatmul.mubr.f32.gmra.mxu0 %v1511
    %v1622 = vpop.f32.mrf.mxu0
    %v1623 = vadd.f32 %v1549, %v1622
    %v1624 = vpop.f32.mrf.mxu0
    %v1625 = vadd.f32 %v1553, %v1624
    %1626 = vdwg.mxu0
    %v1627 = vld [vmem:[#allocation17] sm:$0xff]
    %v1628 = vld [vmem:[#allocation17 + $0x8] sm:$0xff]
    %v1629 = vld [vmem:[#allocation17 + $0x10] sm:$0xff]
    %v1630 = vld [vmem:[#allocation17 + $0x18] sm:$0xff]
    %v1631 = vld [vmem:[#allocation17 + $0x20] sm:$0xff]
    %v1632 = vld [vmem:[#allocation17 + $0x28] sm:$0xff]
    %v1633 = vld [vmem:[#allocation17 + $0x30] sm:$0xff]
    %v1634 = vld [vmem:[#allocation17 + $0x38] sm:$0xff]
    %v1635 = vld [vmem:[#allocation17 + $0x40] sm:$0xff]
    %v1636 = vld [vmem:[#allocation17 + $0x48] sm:$0xff]
    %v1637 = vld [vmem:[#allocation17 + $0x50] sm:$0xff]
    %v1638 = vld [vmem:[#allocation17 + $0x58] sm:$0xff]
    %v1639 = vld [vmem:[#allocation17 + $0x60] sm:$0xff]
    %v1640 = vld [vmem:[#allocation17 + $0x68] sm:$0xff]
    %v1641 = vld [vmem:[#allocation17 + $0x70] sm:$0xff]
    %v1642 = vld [vmem:[#allocation17 + $0x78] sm:$0xff]
    %v1643 = vld [vmem:[#allocation17 + $0x80] sm:$0xff]
    %v1644 = vld [vmem:[#allocation17 + $0x88] sm:$0xff]
    %v1645 = vld [vmem:[#allocation17 + $0x90] sm:$0xff]
    %v1646 = vld [vmem:[#allocation17 + $0x98] sm:$0xff]
    %v1647 = vld [vmem:[#allocation17 + $0xa0] sm:$0xff]
    %v1648 = vld [vmem:[#allocation17 + $0xa8] sm:$0xff]
    %v1649 = vld [vmem:[#allocation17 + $0xb0] sm:$0xff]
    %v1650 = vld [vmem:[#allocation17 + $0xb8] sm:$0xff]
    %v1651 = vld [vmem:[#allocation17 + $0xc0] sm:$0xff]
    %v1652 = vld [vmem:[#allocation17 + $0xc8] sm:$0xff]
    %v1653 = vld [vmem:[#allocation17 + $0xd0] sm:$0xff]
    %v1654 = vld [vmem:[#allocation17 + $0xd8] sm:$0xff]
    %v1655 = vld [vmem:[#allocation17 + $0xe0] sm:$0xff]
    %v1656 = vld [vmem:[#allocation17 + $0xe8] sm:$0xff]
    %v1657 = vld [vmem:[#allocation17 + $0xf0] sm:$0xff]
    %v1658 = vld [vmem:[#allocation17 + $0xf8] sm:$0xff]
    %v1659 = vld [vmem:[#allocation17 + $0x100] sm:$0xff]
    %v1660 = vld [vmem:[#allocation17 + $0x108] sm:$0xff]
    %v1661 = vld [vmem:[#allocation17 + $0x110] sm:$0xff]
    %v1662 = vld [vmem:[#allocation17 + $0x118] sm:$0xff]
    %v1663 = vld [vmem:[#allocation17 + $0x120] sm:$0xff]
    %v1664 = vld [vmem:[#allocation17 + $0x128] sm:$0xff]
    %v1665 = vld [vmem:[#allocation17 + $0x130] sm:$0xff]
    %v1666 = vld [vmem:[#allocation17 + $0x138] sm:$0xff]
    %v1667 = vld [vmem:[#allocation17 + $0x140] sm:$0xff]
    %v1668 = vld [vmem:[#allocation17 + $0x148] sm:$0xff]
    %v1669 = vld [vmem:[#allocation17 + $0x150] sm:$0xff]
    %v1670 = vld [vmem:[#allocation17 + $0x158] sm:$0xff]
    %v1671 = vld [vmem:[#allocation17 + $0x160] sm:$0xff]
    %v1672 = vld [vmem:[#allocation17 + $0x168] sm:$0xff]
    %v1673 = vld [vmem:[#allocation17 + $0x170] sm:$0xff]
    %v1674 = vld [vmem:[#allocation17 + $0x178] sm:$0xff]
    %v1675 = vld [vmem:[#allocation17 + $0x180] sm:$0xff]
    %v1676 = vld [vmem:[#allocation17 + $0x188] sm:$0xff]
    %v1677 = vld [vmem:[#allocation17 + $0x190] sm:$0xff]
    %v1678 = vld [vmem:[#allocation17 + $0x198] sm:$0xff]
    %v1679 = vld [vmem:[#allocation17 + $0x1a0] sm:$0xff]
    %v1680 = vld [vmem:[#allocation17 + $0x1a8] sm:$0xff]
    %v1681 = vld [vmem:[#allocation17 + $0x1b0] sm:$0xff]
    %v1682 = vld [vmem:[#allocation17 + $0x1b8] sm:$0xff]
    %v1683 = vld [vmem:[#allocation17 + $0x1c0] sm:$0xff]
    %v1684 = vld [vmem:[#allocation17 + $0x1c8] sm:$0xff]
    %v1685 = vld [vmem:[#allocation17 + $0x1d0] sm:$0xff]
    %v1686 = vld [vmem:[#allocation17 + $0x1d8] sm:$0xff]
    %v1687 = vld [vmem:[#allocation17 + $0x1e0] sm:$0xff]
    %v1688 = vld [vmem:[#allocation17 + $0x1e8] sm:$0xff]
    %v1689 = vld [vmem:[#allocation17 + $0x1f0] sm:$0xff]
    %v1690 = vld [vmem:[#allocation17 + $0x1f8] sm:$0xff]
    %v1691 = vld [vmem:[#allocation17 + $0x200] sm:$0xff]
    %v1692 = vld [vmem:[#allocation17 + $0x208] sm:$0xff]
    %v1693 = vld [vmem:[#allocation17 + $0x210] sm:$0xff]
    %v1694 = vld [vmem:[#allocation17 + $0x218] sm:$0xff]
    %v1695 = vld [vmem:[#allocation17 + $0x220] sm:$0xff]
    %v1696 = vld [vmem:[#allocation17 + $0x228] sm:$0xff]
    %v1697 = vld [vmem:[#allocation17 + $0x230] sm:$0xff]
    %v1698 = vld [vmem:[#allocation17 + $0x238] sm:$0xff]
    %v1699 = vld [vmem:[#allocation17 + $0x240] sm:$0xff]
    %v1700 = vld [vmem:[#allocation17 + $0x248] sm:$0xff]
    %v1701 = vld [vmem:[#allocation17 + $0x250] sm:$0xff]
    %v1702 = vld [vmem:[#allocation17 + $0x258] sm:$0xff]
    %v1703 = vld [vmem:[#allocation17 + $0x260] sm:$0xff]
    %v1704 = vld [vmem:[#allocation17 + $0x268] sm:$0xff]
    %v1705 = vld [vmem:[#allocation17 + $0x270] sm:$0xff]
    %v1706 = vld [vmem:[#allocation17 + $0x278] sm:$0xff]
    %v1707 = vld [vmem:[#allocation17 + $0x280] sm:$0xff]
    %v1708 = vld [vmem:[#allocation17 + $0x288] sm:$0xff]
    %v1709 = vld [vmem:[#allocation17 + $0x290] sm:$0xff]
    %v1710 = vld [vmem:[#allocation17 + $0x298] sm:$0xff]
    %v1711 = vld [vmem:[#allocation17 + $0x2a0] sm:$0xff]
    %v1712 = vld [vmem:[#allocation17 + $0x2a8] sm:$0xff]
    %v1713 = vld [vmem:[#allocation17 + $0x2b0] sm:$0xff]
    %v1714 = vld [vmem:[#allocation17 + $0x2b8] sm:$0xff]
    %v1715 = vld [vmem:[#allocation17 + $0x2c0] sm:$0xff]
    %v1716 = vld [vmem:[#allocation17 + $0x2c8] sm:$0xff]
    %v1717 = vld [vmem:[#allocation17 + $0x2d0] sm:$0xff]
    %v1718 = vld [vmem:[#allocation17 + $0x2d8] sm:$0xff]
    %v1719 = vld [vmem:[#allocation17 + $0x2e0] sm:$0xff]
    %v1720 = vld [vmem:[#allocation17 + $0x2e8] sm:$0xff]
    %v1721 = vld [vmem:[#allocation17 + $0x2f0] sm:$0xff]
    %v1722 = vld [vmem:[#allocation17 + $0x2f8] sm:$0xff]
    %v1723 = vld [vmem:[#allocation17 + $0x300] sm:$0xff]
    %v1724 = vld [vmem:[#allocation17 + $0x308] sm:$0xff]
    %v1725 = vld [vmem:[#allocation17 + $0x310] sm:$0xff]
    %v1726 = vld [vmem:[#allocation17 + $0x318] sm:$0xff]
    %v1727 = vld [vmem:[#allocation17 + $0x320] sm:$0xff]
    %v1728 = vld [vmem:[#allocation17 + $0x328] sm:$0xff]
    %v1729 = vld [vmem:[#allocation17 + $0x330] sm:$0xff]
    %v1730 = vld [vmem:[#allocation17 + $0x338] sm:$0xff]
    %v1731 = vld [vmem:[#allocation17 + $0x340] sm:$0xff]
    %v1732 = vld [vmem:[#allocation17 + $0x348] sm:$0xff]
    %v1733 = vld [vmem:[#allocation17 + $0x350] sm:$0xff]
    %v1734 = vld [vmem:[#allocation17 + $0x358] sm:$0xff]
    %v1735 = vld [vmem:[#allocation17 + $0x360] sm:$0xff]
    %v1736 = vld [vmem:[#allocation17 + $0x368] sm:$0xff]
    %v1737 = vld [vmem:[#allocation17 + $0x370] sm:$0xff]
    %v1738 = vld [vmem:[#allocation17 + $0x378] sm:$0xff]
    %v1739 = vld [vmem:[#allocation17 + $0x380] sm:$0xff]
    %v1740 = vld [vmem:[#allocation17 + $0x388] sm:$0xff]
    %v1741 = vld [vmem:[#allocation17 + $0x390] sm:$0xff]
    %v1742 = vld [vmem:[#allocation17 + $0x398] sm:$0xff]
    %v1743 = vld [vmem:[#allocation17 + $0x3a0] sm:$0xff]
    %v1744 = vld [vmem:[#allocation17 + $0x3a8] sm:$0xff]
    %v1745 = vld [vmem:[#allocation17 + $0x3b0] sm:$0xff]
    %v1746 = vld [vmem:[#allocation17 + $0x3b8] sm:$0xff]
    %v1747 = vld [vmem:[#allocation17 + $0x3c0] sm:$0xff]
    %v1748 = vld [vmem:[#allocation17 + $0x3c8] sm:$0xff]
    %v1749 = vld [vmem:[#allocation17 + $0x3d0] sm:$0xff]
    %v1750 = vld [vmem:[#allocation17 + $0x3d8] sm:$0xff]
    %v1751 = vld [vmem:[#allocation17 + $0x3e0] sm:$0xff]
    %v1752 = vld [vmem:[#allocation17 + $0x3e8] sm:$0xff]
    %v1753 = vld [vmem:[#allocation17 + $0x3f0] sm:$0xff]
    %v1754 = vld [vmem:[#allocation17 + $0x3f8] sm:$0xff]
    %v1755 = vld [vmem:[%s16] sm:$0xf]
    %v1757 = vlaneseq
    %v1758 = vshrl.u32 %v1757, 7
    %v1759 = vsub.s32 0, %v1758
    %v1760 = vrot.slane %v1755, %v1759
    %v1761 = vlaneseq
    %v1762 = vshrl.u32 %v1761, 7
    %v1763 = vsub.s32 1, %v1762
    %v1764 = vrot.slane %v1755, %v1763
    %v1765 = vlaneseq
    %v1766 = vshrl.u32 %v1765, 7
    %v1767 = vsub.s32 2, %v1766
    %v1768 = vrot.slane %v1755, %v1767
    %v1769 = vlaneseq
    %v1770 = vshrl.u32 %v1769, 7
    %v1771 = vsub.s32 3, %v1770
    %v1772 = vrot.slane %v1755, %v1771
    %1777 = vmatprep.subr.mxu0 %v1688
    %1778 = vmatpush1.msra.mxu0 %v1687
    %1779 = vmatprep.subr.mxu0 %v1684
    %1780 = vmatpush1.msra.mxu0 %v1683
    %1781 = vmatprep.subr.mxu0 %v1680
    %1782 = vmatpush1.msra.mxu0 %v1679
    %1783 = vmatprep.subr.mxu0 %v1676
    %1784 = vmatpush1.msra.mxu0 %v1675
    %1785 = vmatprep.subr.mxu0 %v1672
    %1786 = vmatpush1.msra.mxu0 %v1671
    %1787 = vmatprep.subr.mxu0 %v1668
    %1788 = vmatpush1.msra.mxu0 %v1667
    %1789 = vmatprep.subr.mxu0 %v1664
    %1790 = vmatpush1.msra.mxu0 %v1663
    %1791 = vmatprep.subr.mxu0 %v1660
    %1792 = vmatpush1.msra.mxu0 %v1659
    %1793 = vmatprep.subr.mxu0 %v1656
    %1794 = vmatpush1.msra.mxu0 %v1655
    %1795 = vmatprep.subr.mxu0 %v1652
    %1796 = vmatpush1.msra.mxu0 %v1651
    %1797 = vmatprep.subr.mxu0 %v1648
    %1798 = vmatpush1.msra.mxu0 %v1647
    %1799 = vmatprep.subr.mxu0 %v1644
    %1800 = vmatpush1.msra.mxu0 %v1643
    %1801 = vmatprep.subr.mxu0 %v1640
    %1802 = vmatpush1.msra.mxu0 %v1639
    %1803 = vmatprep.subr.mxu0 %v1636
    %1804 = vmatpush1.msra.mxu0 %v1635
    %1805 = vmatprep.subr.mxu0 %v1632
    %1806 = vmatpush1.msra.mxu0 %v1631
    %1807 = vmatprep.subr.mxu0 %v1628
    %1808 = vmatpush1.msra.mxu0 %v1627
    %1809 = vmatprep.subr.mxu0 %v1752
    %1810 = vmatpush2.msra.mxu0 %v1751
    %1811 = vmatprep.subr.mxu0 %v1748
    %1812 = vmatpush2.msra.mxu0 %v1747
    %1813 = vmatprep.subr.mxu0 %v1744
    %1814 = vmatpush2.msra.mxu0 %v1743
    %1815 = vmatprep.subr.mxu0 %v1740
    %1816 = vmatpush2.msra.mxu0 %v1739
    %1817 = vmatprep.subr.mxu0 %v1736
    %1818 = vmatpush2.msra.mxu0 %v1735
    %1819 = vmatprep.subr.mxu0 %v1732
    %1820 = vmatpush2.msra.mxu0 %v1731
    %1821 = vmatprep.subr.mxu0 %v1728
    %1822 = vmatpush2.msra.mxu0 %v1727
    %1823 = vmatprep.subr.mxu0 %v1724
    %1824 = vmatpush2.msra.mxu0 %v1723
    %1825 = vmatprep.subr.mxu0 %v1720
    %1826 = vmatpush2.msra.mxu0 %v1719
    %1827 = vmatprep.subr.mxu0 %v1716
    %1828 = vmatpush2.msra.mxu0 %v1715
    %1829 = vmatprep.subr.mxu0 %v1712
    %1830 = vmatpush2.msra.mxu0 %v1711
    %1831 = vmatprep.subr.mxu0 %v1708
    %1832 = vmatpush2.msra.mxu0 %v1707
    %1833 = vmatprep.subr.mxu0 %v1704
    %1834 = vmatpush2.msra.mxu0 %v1703
    %1835 = vmatprep.subr.mxu0 %v1700
    %1836 = vmatpush2.msra.mxu0 %v1699
    %1837 = vmatprep.subr.mxu0 %v1696
    %1838 = vmatpush2.msra.mxu0 %v1695
    %1839 = vmatprep.subr.mxu0 %v1692
    %1840 = vmatpush2.msra.mxu0 %v1691
    %1841 = vmatprep.mubr.f32.mxu0 %v1625
    %1842 = vmatmul.mubr.f32.gmra.mxu0 %v1623
    %v1843 = vpop.f32.mrf.mxu0
    %v1844 = vadd.f32 %v1760, %v1843
    %v1845 = vpop.f32.mrf.mxu0
    %v1846 = vadd.f32 %v1764, %v1845
    %1847 = vdwg.mxu0
    %1848 = vmatprep.subr.mxu0 %v1690
    %1849 = vmatpush1.msra.mxu0 %v1689
    %1850 = vmatprep.subr.mxu0 %v1686
    %1851 = vmatpush1.msra.mxu0 %v1685
    %1852 = vmatprep.subr.mxu0 %v1682
    %1853 = vmatpush1.msra.mxu0 %v1681
    %1854 = vmatprep.subr.mxu0 %v1678
    %1855 = vmatpush1.msra.mxu0 %v1677
    %1856 = vmatprep.subr.mxu0 %v1674
    %1857 = vmatpush1.msra.mxu0 %v1673
    %1858 = vmatprep.subr.mxu0 %v1670
    %1859 = vmatpush1.msra.mxu0 %v1669
    %1860 = vmatprep.subr.mxu0 %v1666
    %1861 = vmatpush1.msra.mxu0 %v1665
    %1862 = vmatprep.subr.mxu0 %v1662
    %1863 = vmatpush1.msra.mxu0 %v1661
    %1864 = vmatprep.subr.mxu0 %v1658
    %1865 = vmatpush1.msra.mxu0 %v1657
    %1866 = vmatprep.subr.mxu0 %v1654
    %1867 = vmatpush1.msra.mxu0 %v1653
    %1868 = vmatprep.subr.mxu0 %v1650
    %1869 = vmatpush1.msra.mxu0 %v1649
    %1870 = vmatprep.subr.mxu0 %v1646
    %1871 = vmatpush1.msra.mxu0 %v1645
    %1872 = vmatprep.subr.mxu0 %v1642
    %1873 = vmatpush1.msra.mxu0 %v1641
    %1874 = vmatprep.subr.mxu0 %v1638
    %1875 = vmatpush1.msra.mxu0 %v1637
    %1876 = vmatprep.subr.mxu0 %v1634
    %1877 = vmatpush1.msra.mxu0 %v1633
    %1878 = vmatprep.subr.mxu0 %v1630
    %1879 = vmatpush1.msra.mxu0 %v1629
    %1880 = vmatprep.subr.mxu0 %v1754
    %1881 = vmatpush2.msra.mxu0 %v1753
    %1882 = vmatprep.subr.mxu0 %v1750
    %1883 = vmatpush2.msra.mxu0 %v1749
    %1884 = vmatprep.subr.mxu0 %v1746
    %1885 = vmatpush2.msra.mxu0 %v1745
    %1886 = vmatprep.subr.mxu0 %v1742
    %1887 = vmatpush2.msra.mxu0 %v1741
    %1888 = vmatprep.subr.mxu0 %v1738
    %1889 = vmatpush2.msra.mxu0 %v1737
    %1890 = vmatprep.subr.mxu0 %v1734
    %1891 = vmatpush2.msra.mxu0 %v1733
    %1892 = vmatprep.subr.mxu0 %v1730
    %1893 = vmatpush2.msra.mxu0 %v1729
    %1894 = vmatprep.subr.mxu0 %v1726
    %1895 = vmatpush2.msra.mxu0 %v1725
    %1896 = vmatprep.subr.mxu0 %v1722
    %1897 = vmatpush2.msra.mxu0 %v1721
    %1898 = vmatprep.subr.mxu0 %v1718
    %1899 = vmatpush2.msra.mxu0 %v1717
    %1900 = vmatprep.subr.mxu0 %v1714
    %1901 = vmatpush2.msra.mxu0 %v1713
    %1902 = vmatprep.subr.mxu0 %v1710
    %1903 = vmatpush2.msra.mxu0 %v1709
    %1904 = vmatprep.subr.mxu0 %v1706
    %1905 = vmatpush2.msra.mxu0 %v1705
    %1906 = vmatprep.subr.mxu0 %v1702
    %1907 = vmatpush2.msra.mxu0 %v1701
    %1908 = vmatprep.subr.mxu0 %v1698
    %1909 = vmatpush2.msra.mxu0 %v1697
    %1910 = vmatprep.subr.mxu0 %v1694
    %1911 = vmatpush2.msra.mxu0 %v1693
    %1912 = vmatprep.mubr.f32.mxu0 %v1625
    %1913 = vmatmul.mubr.f32.gmra.mxu0 %v1623
    %v1914 = vpop.f32.mrf.mxu0
    %v1915 = vadd.f32 %v1768, %v1914
    %v1916 = vpop.f32.mrf.mxu0
    %v1917 = vadd.f32 %v1772, %v1916
    %1918 = vdwg.mxu0
    %v1919 = vmax.f32 %v1844, 0.0
    %v1920 = vmax.f32 %v1846, 0.0
    %v1921 = vmax.f32 %v1915, 0.0
    %v1922 = vmax.f32 %v1917, 0.0
    %v1923 = vld [vmem:[#allocation19] sm:$0xff]
    %v1924 = vld [vmem:[#allocation19 + $0x8] sm:$0xff]
    %v1925 = vld [vmem:[#allocation19 + $0x10] sm:$0xff]
    %v1926 = vld [vmem:[#allocation19 + $0x18] sm:$0xff]
    %v1927 = vld [vmem:[#allocation19 + $0x20] sm:$0xff]
    %v1928 = vld [vmem:[#allocation19 + $0x28] sm:$0xff]
    %v1929 = vld [vmem:[#allocation19 + $0x30] sm:$0xff]
    %v1930 = vld [vmem:[#allocation19 + $0x38] sm:$0xff]
    %v1931 = vld [vmem:[#allocation19 + $0x40] sm:$0xff]
    %v1932 = vld [vmem:[#allocation19 + $0x48] sm:$0xff]
    %v1933 = vld [vmem:[#allocation19 + $0x50] sm:$0xff]
    %v1934 = vld [vmem:[#allocation19 + $0x58] sm:$0xff]
    %v1935 = vld [vmem:[#allocation19 + $0x60] sm:$0xff]
    %v1936 = vld [vmem:[#allocation19 + $0x68] sm:$0xff]
    %v1937 = vld [vmem:[#allocation19 + $0x70] sm:$0xff]
    %v1938 = vld [vmem:[#allocation19 + $0x78] sm:$0xff]
    %v1939 = vld [vmem:[#allocation19 + $0x80] sm:$0xff]
    %v1940 = vld [vmem:[#allocation19 + $0x88] sm:$0xff]
    %v1941 = vld [vmem:[#allocation19 + $0x90] sm:$0xff]
    %v1942 = vld [vmem:[#allocation19 + $0x98] sm:$0xff]
    %v1943 = vld [vmem:[#allocation19 + $0xa0] sm:$0xff]
    %v1944 = vld [vmem:[#allocation19 + $0xa8] sm:$0xff]
    %v1945 = vld [vmem:[#allocation19 + $0xb0] sm:$0xff]
    %v1946 = vld [vmem:[#allocation19 + $0xb8] sm:$0xff]
    %v1947 = vld [vmem:[#allocation19 + $0xc0] sm:$0xff]
    %v1948 = vld [vmem:[#allocation19 + $0xc8] sm:$0xff]
    %v1949 = vld [vmem:[#allocation19 + $0xd0] sm:$0xff]
    %v1950 = vld [vmem:[#allocation19 + $0xd8] sm:$0xff]
    %v1951 = vld [vmem:[#allocation19 + $0xe0] sm:$0xff]
    %v1952 = vld [vmem:[#allocation19 + $0xe8] sm:$0xff]
    %v1953 = vld [vmem:[#allocation19 + $0xf0] sm:$0xff]
    %v1954 = vld [vmem:[#allocation19 + $0xf8] sm:$0xff]
    %v1955 = vld [vmem:[#allocation19 + $0x100] sm:$0xff]
    %v1956 = vld [vmem:[#allocation19 + $0x108] sm:$0xff]
    %v1957 = vld [vmem:[#allocation19 + $0x110] sm:$0xff]
    %v1958 = vld [vmem:[#allocation19 + $0x118] sm:$0xff]
    %v1959 = vld [vmem:[#allocation19 + $0x120] sm:$0xff]
    %v1960 = vld [vmem:[#allocation19 + $0x128] sm:$0xff]
    %v1961 = vld [vmem:[#allocation19 + $0x130] sm:$0xff]
    %v1962 = vld [vmem:[#allocation19 + $0x138] sm:$0xff]
    %v1963 = vld [vmem:[#allocation19 + $0x140] sm:$0xff]
    %v1964 = vld [vmem:[#allocation19 + $0x148] sm:$0xff]
    %v1965 = vld [vmem:[#allocation19 + $0x150] sm:$0xff]
    %v1966 = vld [vmem:[#allocation19 + $0x158] sm:$0xff]
    %v1967 = vld [vmem:[#allocation19 + $0x160] sm:$0xff]
    %v1968 = vld [vmem:[#allocation19 + $0x168] sm:$0xff]
    %v1969 = vld [vmem:[#allocation19 + $0x170] sm:$0xff]
    %v1970 = vld [vmem:[#allocation19 + $0x178] sm:$0xff]
    %v1971 = vld [vmem:[#allocation19 + $0x180] sm:$0xff]
    %v1972 = vld [vmem:[#allocation19 + $0x188] sm:$0xff]
    %v1973 = vld [vmem:[#allocation19 + $0x190] sm:$0xff]
    %v1974 = vld [vmem:[#allocation19 + $0x198] sm:$0xff]
    %v1975 = vld [vmem:[#allocation19 + $0x1a0] sm:$0xff]
    %v1976 = vld [vmem:[#allocation19 + $0x1a8] sm:$0xff]
    %v1977 = vld [vmem:[#allocation19 + $0x1b0] sm:$0xff]
    %v1978 = vld [vmem:[#allocation19 + $0x1b8] sm:$0xff]
    %v1979 = vld [vmem:[#allocation19 + $0x1c0] sm:$0xff]
    %v1980 = vld [vmem:[#allocation19 + $0x1c8] sm:$0xff]
    %v1981 = vld [vmem:[#allocation19 + $0x1d0] sm:$0xff]
    %v1982 = vld [vmem:[#allocation19 + $0x1d8] sm:$0xff]
    %v1983 = vld [vmem:[#allocation19 + $0x1e0] sm:$0xff]
    %v1984 = vld [vmem:[#allocation19 + $0x1e8] sm:$0xff]
    %v1985 = vld [vmem:[#allocation19 + $0x1f0] sm:$0xff]
    %v1986 = vld [vmem:[#allocation19 + $0x1f8] sm:$0xff]
    %v1987 = vld [vmem:[%s18] sm:$0x1]
    %v1989 = vlaneseq
    %v1990 = vshrl.u32 %v1989, 7
    %v1991 = vsub.s32 0, %v1990
    %v1992 = vrot.slane %v1987, %v1991
    %1994 = vmatprep.subr.mxu0 0.0
    %1995 = vmatpush1.msra.mxu0 %v1938
    %1996 = vmatprep.subr.mxu0 0.0
    %1997 = vmatpush1.msra.mxu0 %v1937
    %1998 = vmatprep.subr.mxu0 0.0
    %1999 = vmatpush1.msra.mxu0 %v1936
    %2000 = vmatprep.subr.mxu0 0.0
    %2001 = vmatpush1.msra.mxu0 %v1935
    %2002 = vmatprep.subr.mxu0 0.0
    %2003 = vmatpush1.msra.mxu0 %v1934
    %2004 = vmatprep.subr.mxu0 0.0
    %2005 = vmatpush1.msra.mxu0 %v1933
    %2006 = vmatprep.subr.mxu0 0.0
    %2007 = vmatpush1.msra.mxu0 %v1932
    %2008 = vmatprep.subr.mxu0 0.0
    %2009 = vmatpush1.msra.mxu0 %v1931
    %2010 = vmatprep.subr.mxu0 0.0
    %2011 = vmatpush1.msra.mxu0 %v1930
    %2012 = vmatprep.subr.mxu0 0.0
    %2013 = vmatpush1.msra.mxu0 %v1929
    %2014 = vmatprep.subr.mxu0 0.0
    %2015 = vmatpush1.msra.mxu0 %v1928
    %2016 = vmatprep.subr.mxu0 0.0
    %2017 = vmatpush1.msra.mxu0 %v1927
    %2018 = vmatprep.subr.mxu0 0.0
    %2019 = vmatpush1.msra.mxu0 %v1926
    %2020 = vmatprep.subr.mxu0 0.0
    %2021 = vmatpush1.msra.mxu0 %v1925
    %2022 = vmatprep.subr.mxu0 0.0
    %2023 = vmatpush1.msra.mxu0 %v1924
    %2024 = vmatprep.subr.mxu0 0.0
    %2025 = vmatpush1.msra.mxu0 %v1923
    %2026 = vmatprep.subr.mxu0 0.0
    %2027 = vmatpush2.msra.mxu0 %v1954
    %2028 = vmatprep.subr.mxu0 0.0
    %2029 = vmatpush2.msra.mxu0 %v1953
    %2030 = vmatprep.subr.mxu0 0.0
    %2031 = vmatpush2.msra.mxu0 %v1952
    %2032 = vmatprep.subr.mxu0 0.0
    %2033 = vmatpush2.msra.mxu0 %v1951
    %2034 = vmatprep.subr.mxu0 0.0
    %2035 = vmatpush2.msra.mxu0 %v1950
    %2036 = vmatprep.subr.mxu0 0.0
    %2037 = vmatpush2.msra.mxu0 %v1949
    %2038 = vmatprep.subr.mxu0 0.0
    %2039 = vmatpush2.msra.mxu0 %v1948
    %2040 = vmatprep.subr.mxu0 0.0
    %2041 = vmatpush2.msra.mxu0 %v1947
    %2042 = vmatprep.subr.mxu0 0.0
    %2043 = vmatpush2.msra.mxu0 %v1946
    %2044 = vmatprep.subr.mxu0 0.0
    %2045 = vmatpush2.msra.mxu0 %v1945
    %2046 = vmatprep.subr.mxu0 0.0
    %2047 = vmatpush2.msra.mxu0 %v1944
    %2048 = vmatprep.subr.mxu0 0.0
    %2049 = vmatpush2.msra.mxu0 %v1943
    %2050 = vmatprep.subr.mxu0 0.0
    %2051 = vmatpush2.msra.mxu0 %v1942
    %2052 = vmatprep.subr.mxu0 0.0
    %2053 = vmatpush2.msra.mxu0 %v1941
    %2054 = vmatprep.subr.mxu0 0.0
    %2055 = vmatpush2.msra.mxu0 %v1940
    %2056 = vmatprep.subr.mxu0 0.0
    %2057 = vmatpush2.msra.mxu0 %v1939
    %2058 = vmatprep.mubr.f32.mxu0 %v1920
    %2059 = vmatmul.mubr.f32.gmra.mxu0 %v1919
    %v2060 = vpop.f32.mrf.mxu0
    %v2061 = vadd.f32 %v1992, %v2060
    %v2062 = vpop.f32.mrf.mxu0
    %2063 = vdwg.mxu0
    %2064 = vmatprep.subr.mxu0 0.0
    %2065 = vmatpush1.msra.mxu0 %v1970
    %2066 = vmatprep.subr.mxu0 0.0
    %2067 = vmatpush1.msra.mxu0 %v1969
    %2068 = vmatprep.subr.mxu0 0.0
    %2069 = vmatpush1.msra.mxu0 %v1968
    %2070 = vmatprep.subr.mxu0 0.0
    %2071 = vmatpush1.msra.mxu0 %v1967
    %2072 = vmatprep.subr.mxu0 0.0
    %2073 = vmatpush1.msra.mxu0 %v1966
    %2074 = vmatprep.subr.mxu0 0.0
    %2075 = vmatpush1.msra.mxu0 %v1965
    %2076 = vmatprep.subr.mxu0 0.0
    %2077 = vmatpush1.msra.mxu0 %v1964
    %2078 = vmatprep.subr.mxu0 0.0
    %2079 = vmatpush1.msra.mxu0 %v1963
    %2080 = vmatprep.subr.mxu0 0.0
    %2081 = vmatpush1.msra.mxu0 %v1962
    %2082 = vmatprep.subr.mxu0 0.0
    %2083 = vmatpush1.msra.mxu0 %v1961
    %2084 = vmatprep.subr.mxu0 0.0
    %2085 = vmatpush1.msra.mxu0 %v1960
    %2086 = vmatprep.subr.mxu0 0.0
    %2087 = vmatpush1.msra.mxu0 %v1959
    %2088 = vmatprep.subr.mxu0 0.0
    %2089 = vmatpush1.msra.mxu0 %v1958
    %2090 = vmatprep.subr.mxu0 0.0
    %2091 = vmatpush1.msra.mxu0 %v1957
    %2092 = vmatprep.subr.mxu0 0.0
    %2093 = vmatpush1.msra.mxu0 %v1956
    %2094 = vmatprep.subr.mxu0 0.0
    %2095 = vmatpush1.msra.mxu0 %v1955
    %2096 = vmatprep.subr.mxu0 0.0
    %2097 = vmatpush2.msra.mxu0 %v1986
    %2098 = vmatprep.subr.mxu0 0.0
    %2099 = vmatpush2.msra.mxu0 %v1985
    %2100 = vmatprep.subr.mxu0 0.0
    %2101 = vmatpush2.msra.mxu0 %v1984
    %2102 = vmatprep.subr.mxu0 0.0
    %2103 = vmatpush2.msra.mxu0 %v1983
    %2104 = vmatprep.subr.mxu0 0.0
    %2105 = vmatpush2.msra.mxu0 %v1982
    %2106 = vmatprep.subr.mxu0 0.0
    %2107 = vmatpush2.msra.mxu0 %v1981
    %2108 = vmatprep.subr.mxu0 0.0
    %2109 = vmatpush2.msra.mxu0 %v1980
    %2110 = vmatprep.subr.mxu0 0.0
    %2111 = vmatpush2.msra.mxu0 %v1979
    %2112 = vmatprep.subr.mxu0 0.0
    %2113 = vmatpush2.msra.mxu0 %v1978
    %2114 = vmatprep.subr.mxu0 0.0
    %2115 = vmatpush2.msra.mxu0 %v1977
    %2116 = vmatprep.subr.mxu0 0.0
    %2117 = vmatpush2.msra.mxu0 %v1976
    %2118 = vmatprep.subr.mxu0 0.0
    %2119 = vmatpush2.msra.mxu0 %v1975
    %2120 = vmatprep.subr.mxu0 0.0
    %2121 = vmatpush2.msra.mxu0 %v1974
    %2122 = vmatprep.subr.mxu0 0.0
    %2123 = vmatpush2.msra.mxu0 %v1973
    %2124 = vmatprep.subr.mxu0 0.0
    %2125 = vmatpush2.msra.mxu0 %v1972
    %2126 = vmatprep.subr.mxu0 0.0
    %2127 = vmatpush2.msra.mxu0 %v1971
    %2128 = vmatprep.mubr.f32.mxu0 %v1922
    %2129 = vmatmul.mubr.f32.gmra.mxu0 %v1921
    %v2130 = vpop.f32.mrf.mxu0
    %v2131 = vadd.f32 %v2061, %v2130
    %v2132 = vpop.f32.mrf.mxu0
    %2133 = vdwg.mxu0
    %v2134 = vmul.f32 %v2131, 0.5
    %v2135 = vtanh.pop %v2134
    %v2136 = vadd.f32 %v2135, 1.0
    %v2137 = vmul.f32 %v2136, 0.5
    %2138 = vst [vmem:[#allocation20] sm:$0xff] %v2137
    // Predicated region
    $region122: #{tpu_custom_call.1} parent=1 // pred_check
      _
    $region123: #{tpu_custom_call.1} parent=1 // pred_check_branch
      %2140 = sbr.rel (0) target = $region125
    $region124: #{tpu_custom_call.1} parent=1 // pred_region
      %s2142 = ssub.s32 128, 128
      %2143 = vsyncadd [#allocation4], %s2142
      %s2145 = sshll.u32 [#allocation20], 4
      %s2146 = int_to_ptr.vmem [resolvable:$true] %s2145
      %2148 = dma.vmem_to_hbm [thread:$0]  %s2146, 128, %s19, [#allocation4]
    $region125: #{tpu_custom_call.1} parent=1 // pred_fallthru
      _
    // Predicated region
    $region126: #{tpu_custom_call.1} parent=1 // pred_check
      _
    $region127: #{tpu_custom_call.1} parent=1 // pred_check_branch
      %2150 = sbr.rel (0) target = $region129
    $region128: #{tpu_custom_call.1} parent=1 // pred_region
      %2151 = dma.done [#allocation4], 128
    $region129: #{tpu_custom_call.1} parent=1 // pred_fallthru
      _
    %2152 = vsyncpa [#allocation3], 1
    %2153 = vsyncpa [#allocation6], 1
    %2154 = vsyncpa [#allocation9], 1
    %2155 = vsyncpa [#allocation12], 1
    %2156 = vsyncpa [#allocation15], 1
    %2157 = vsyncpa [#allocation18], 1
    %2158 = vsyncpa [#allocation4], 1

</llo_original>
